<compile_context>
chip_gen: v7x
topology: tpu7x:2x2x1
jax: 0.10.0
libtpu: 0.0.40
codegen_flags: <defaults>
</compile_context>

<pallas_src>
import jax
import jax.numpy as jnp
from jax.experimental import pallas as pl
from jax.experimental.pallas import tpu as pltpu

L_REF = 10.0
V_REF = 2000.0
HIDDEN = 128

LANE = 128                 # lane width
MAX_TILE_BLOCKS = 16       # TILE_N cap = 16 * 128 = 2048 lanes per grid step
USE_BF16_MATMUL = True     # bf16 inputs to the two 128x128 matmuls, f32 accum


def _cdiv(a, b):
    return -(-a // b)


def _tiling(n):
    """Pick (tile_n, grid, n_pad, n_chunks) for a batch of n points."""
    blocks = _cdiv(n, LANE)
    # >= 2 grid steps whenever the batch has >= 2 lane-blocks (v7x megacore),
    # and cap the tile at MAX_TILE_BLOCKS lane-blocks.
    tiles = max(min(blocks, 2), _cdiv(blocks, MAX_TILE_BLOCKS))
    bpt = _cdiv(blocks, tiles)            # 128-lane blocks per tile
    tile_n = bpt * LANE
    grid = _cdiv(blocks, bpt)
    n_pad = grid * tile_n
    # Split the tile into 2-4 lane sub-chunks (each >= 256 lanes) so MXU dots
    # and EUP tanh of different chunks can overlap inside one grid step.
    n_chunks = 1
    for c in (4, 3, 2):
        if bpt % c == 0 and bpt // c >= 2:
            n_chunks = c
            break
    return tile_n, grid, n_pad, n_chunks


def _make_kernel(n_chunks, chunk_n):
    def kernel(x_ref, w1_ref, b1_ref, w2_ref, b2_ref, w3_ref, b3_ref,
               w4_ref, b4_ref, o_ref):
        # Resident weights/biases: load once and hoist the lane-broadcasts out
        # of the chunk loop (JAX does not CSE broadcast_in_dim).
        w1c0 = w1_ref[:, 0:1]                                        # (128,1)
        w1c1 = w1_ref[:, 1:2]                                        # (128,1)
        b1 = jnp.broadcast_to(b1_ref[...], (HIDDEN, chunk_n))
        w2 = w2_ref[...]                                             # (128,128)
        b2 = jnp.broadcast_to(b2_ref[...], (HIDDEN, chunk_n))
        w3 = w3_ref[...]                                             # (128,128)
        b3 = jnp.broadcast_to(b3_ref[...], (HIDDEN, chunk_n))
        w4 = jnp.broadcast_to(w4_ref[...], (HIDDEN, chunk_n))
        b4 = b4_ref[...]                                             # (1,1)

        # Unrolled over lane sub-chunks: chunks are independent, so the
        # scheduler can overlap chunk j's MXU dot with chunk j-1's EUP tanh.
        for j in range(n_chunks):
            lo = j * chunk_n
            x = x_ref[:, lo:lo + chunk_n]                            # (2, cN)

            # Layer 1 (in=2): degenerate K=2 matmul on the VPU, f32.
            # 1/L_ref is already folded into w1.
            h = jnp.tanh(w1c0 * x[0:1, :] + w1c1 * x[1:2, :] + b1)   # (128,cN)

            # Hidden layers: 128x128 MXU matmuls, bf16 inputs, f32 accumulate.
            h = jnp.tanh(jnp.dot(w2, h.astype(w2.dtype),
                                 preferred_element_type=jnp.float32) + b2)
            h = jnp.tanh(jnp.dot(w3, h.astype(w3.dtype),
                                 preferred_element_type=jnp.float32) + b3)

            # Output layer (out=1): XLU sublane reduction, lane-dense store.
            o_ref[:, lo:lo + chunk_n] = (
                jnp.sum(w4 * h, axis=0, keepdims=True) + b4)         # (1, cN)
    return kernel


@jax.jit
def pinn_forward(x, params):
    """x: (N, 2) float32; params in PyTorch layout. Returns (N, 1) float32."""
    n = x.shape[0]
    tile_n, grid, n_pad, n_chunks = _tiling(n)
    chunk_n = tile_n // n_chunks

    # Present the batch along lanes: (2, n_pad). Tiny transpose/pad in XLA.
    x_t = jnp.pad(x.T.astype(jnp.float32), ((0, 0), (0, n_pad - n)))

    mm_dtype = jnp.bfloat16 if USE_BF16_MATMUL else jnp.float32
    w1 = (params["w1"] * jnp.float32(1.0 / L_REF)).astype(jnp.float32)
    b1 = params["b1"].reshape(HIDDEN, 1).astype(jnp.float32)
    w2 = params["w2"].astype(mm_dtype)
    b2 = params["b2"].reshape(HIDDEN, 1).astype(jnp.float32)
    w3 = params["w3"].astype(mm_dtype)
    b3 = params["b3"].reshape(HIDDEN, 1).astype(jnp.float32)
    w4 = params["w4"].reshape(HIDDEN, 1).astype(jnp.float32)
    b4 = params["b4"].reshape(1, 1).astype(jnp.float32)

    # Weights/biases are ~100 KiB and resident across all grid steps.
    full = lambda shape: pl.BlockSpec(shape, lambda i: (0, 0))

    out_row = pl.pallas_call(
        _make_kernel(n_chunks, chunk_n),
        out_shape=jax.ShapeDtypeStruct((1, n_pad), jnp.float32),
        grid_spec=pltpu.PrefetchScalarGridSpec(
            num_scalar_prefetch=0,
            grid=(grid,),
            in_specs=[
                pl.BlockSpec((2, tile_n), lambda i: (0, i)),   # x tile
                full((HIDDEN, 2)), full((HIDDEN, 1)),          # layer 1
                full((HIDDEN, HIDDEN)), full((HIDDEN, 1)),     # layer 2
                full((HIDDEN, HIDDEN)), full((HIDDEN, 1)),     # layer 3
                full((HIDDEN, 1)), full((1, 1)),               # output layer
            ],
            out_specs=pl.BlockSpec((1, tile_n), lambda i: (0, i)),
        ),
        compiler_params=pltpu.CompilerParams(
            dimension_semantics=("parallel",)),
    )(x_t, w1, b1, w2, b2, w3, b3, w4, b4)

    return out_row[0, :n].reshape(n, 1)


def init_params(key):
    """PyTorch-Linear-style init, weights in (out_features, in_features)."""
    dims = [2, HIDDEN, HIDDEN, HIDDEN, 1]
    params = {}
    keys = jax.random.split(key, 2 * (len(dims) - 1))
    for li in range(len(dims) - 1):
        fan_in, fan_out = dims[li], dims[li + 1]
        bound = 1.0 / (fan_in ** 0.5)
        wkey, bkey = keys[2 * li], keys[2 * li + 1]
        params[f"w{li + 1}"] = jax.random.uniform(
            wkey, (fan_out, fan_in), jnp.float32, -bound, bound)
        params[f"b{li + 1}"] = jax.random.uniform(
            bkey, (fan_out,), jnp.float32, -bound, bound)
    return params


def pinn_forward_ref(x, params, mm_dtype=jnp.float32):
    """Pure-JAX reference (PyTorch layout). mm_dtype=bf16 matches the kernel's
    hidden-layer matmul precision (inputs cast, f32 accumulation)."""
    y = x / L_REF
    h = jnp.tanh(y @ params["w1"].T + params["b1"])
    h = jnp.tanh(jnp.dot(h.astype(mm_dtype), params["w2"].T.astype(mm_dtype),
                         preferred_element_type=jnp.float32) + params["b2"])
    h = jnp.tanh(jnp.dot(h.astype(mm_dtype), params["w3"].T.astype(mm_dtype),
                         preferred_element_type=jnp.float32) + params["b3"])
    return h @ params["w4"].T + params["b4"]


if __name__ == "__main__":
    key = jax.random.PRNGKey(0)
    pkey, xkey = jax.random.split(key)
    params = init_params(pkey)
    mm_dtype = jnp.bfloat16 if USE_BF16_MATMUL else jnp.float32

    # Collocation points in a [0, 10] x [0, 10] um domain.
    #   N=600  -> 2-step grid of 384-lane tiles (padding + v7x dual-core path)
    #   N=5000 -> 3-step grid of 1792-lane tiles, 2 lane sub-chunks per step
    for N in (600, 5000):
        x = jax.random.uniform(jax.random.fold_in(xkey, N), (N, 2),
                               jnp.float32, 0.0, 10.0)

        out = jax.block_until_ready(pinn_forward(x, params))
        assert out.shape == (N, 1), out.shape

        # Exact check vs a reference with identical matmul precision.
        ref_mixed = pinn_forward_ref(x, params, mm_dtype)
        err_mixed = float(jnp.max(jnp.abs(out - ref_mixed)))
        assert jnp.allclose(out, ref_mixed, atol=1e-3, rtol=1e-3), (N, err_mixed)

        # Sanity check vs the full-f32 PyTorch semantics (bf16 matmul error).
        ref_f32 = pinn_forward_ref(x, params, jnp.float32)
        err_f32 = float(jnp.max(jnp.abs(out - ref_f32)))
        assert jnp.allclose(out, ref_f32, atol=5e-2, rtol=5e-2), (N, err_f32)

    # TODO(synk): compute_gradients / electric_field need autodiff through the
    # network; pallas_call requires a custom_vjp (or a fused fwd+bwd kernel
    # reusing h with tanh' = 1 - h^2) rather than relying on jax.grad directly.
    print("KERNEL_OK")
</pallas_src>

<mosaic_0001>
module attributes {stable_mosaic.version = 11 : i64} {
  func.func @kernel(%arg0: i32, %arg1: memref<2x384xf32, #tpu.memory_space<vmem>>, %arg2: memref<128x2xf32, #tpu.memory_space<vmem>>, %arg3: memref<128x1xf32, #tpu.memory_space<vmem>>, %arg4: memref<128x128xbf16, #tpu.memory_space<vmem>>, %arg5: memref<128x1xf32, #tpu.memory_space<vmem>>, %arg6: memref<128x128xbf16, #tpu.memory_space<vmem>>, %arg7: memref<128x1xf32, #tpu.memory_space<vmem>>, %arg8: memref<128x1xf32, #tpu.memory_space<vmem>>, %arg9: memref<1x1xf32, #tpu.memory_space<vmem>>, %arg10: memref<1x384xf32, #tpu.memory_space<vmem>>) attributes {dimension_semantics = [#tpu.dimension_semantics<parallel>], iteration_bounds = array<i64: 2>, scalar_prefetch = 0 : i64, scratch_operands = 0 : i64, tpu.core_type = #tpu.core_type<tc>, window_params = [{transform_indices = @transform_0, window_bounds = array<i64: 2, 384>}, {pipeline_mode = #tpu.pipeline_mode<synchronous>, transform_indices = @transform_1, window_bounds = array<i64: 128, 2>}, {pipeline_mode = #tpu.pipeline_mode<synchronous>, transform_indices = @transform_2, window_bounds = array<i64: 128, 1>}, {pipeline_mode = #tpu.pipeline_mode<synchronous>, transform_indices = @transform_3, window_bounds = array<i64: 128, 128>}, {pipeline_mode = #tpu.pipeline_mode<synchronous>, transform_indices = @transform_4, window_bounds = array<i64: 128, 1>}, {pipeline_mode = #tpu.pipeline_mode<synchronous>, transform_indices = @transform_5, window_bounds = array<i64: 128, 128>}, {pipeline_mode = #tpu.pipeline_mode<synchronous>, transform_indices = @transform_6, window_bounds = array<i64: 128, 1>}, {pipeline_mode = #tpu.pipeline_mode<synchronous>, transform_indices = @transform_7, window_bounds = array<i64: 128, 1>}, {pipeline_mode = #tpu.pipeline_mode<synchronous>, transform_indices = @transform_8, window_bounds = array<i64: 1, 1>}, {transform_indices = @transform_9, window_bounds = array<i64: 1, 384>}]} {
    %c0 = arith.constant 0 : index
    %c0_0 = arith.constant 0 : index
    %0 = vector.load %arg2[%c0, %c0_0] : memref<128x2xf32, #tpu.memory_space<vmem>>, vector<128x1xf32>
    %c0_1 = arith.constant 0 : index
    %c1 = arith.constant 1 : index
    %1 = vector.load %arg2[%c0_1, %c1] : memref<128x2xf32, #tpu.memory_space<vmem>>, vector<128x1xf32>
    %c0_2 = arith.constant 0 : index
    %c0_3 = arith.constant 0 : index
    %2 = vector.load %arg3[%c0_2, %c0_3] : memref<128x1xf32, #tpu.memory_space<vmem>>, vector<128x1xf32>
    %3 = vector.shape_cast %2 : vector<128x1xf32> to vector<128x1xf32>
    %4 = vector.broadcast %3 : vector<128x1xf32> to vector<128x384xf32>
    %c0_4 = arith.constant 0 : index
    %c0_5 = arith.constant 0 : index
    %5 = vector.load %arg4[%c0_4, %c0_5] : memref<128x128xbf16, #tpu.memory_space<vmem>>, vector<128x128xbf16>
    %c0_6 = arith.constant 0 : index
    %c0_7 = arith.constant 0 : index
    %6 = vector.load %arg5[%c0_6, %c0_7] : memref<128x1xf32, #tpu.memory_space<vmem>>, vector<128x1xf32>
    %7 = vector.shape_cast %6 : vector<128x1xf32> to vector<128x1xf32>
    %8 = vector.broadcast %7 : vector<128x1xf32> to vector<128x384xf32>
    %c0_8 = arith.constant 0 : index
    %c0_9 = arith.constant 0 : index
    %9 = vector.load %arg6[%c0_8, %c0_9] : memref<128x128xbf16, #tpu.memory_space<vmem>>, vector<128x128xbf16>
    %c0_10 = arith.constant 0 : index
    %c0_11 = arith.constant 0 : index
    %10 = vector.load %arg7[%c0_10, %c0_11] : memref<128x1xf32, #tpu.memory_space<vmem>>, vector<128x1xf32>
    %11 = vector.shape_cast %10 : vector<128x1xf32> to vector<128x1xf32>
    %12 = vector.broadcast %11 : vector<128x1xf32> to vector<128x384xf32>
    %c0_12 = arith.constant 0 : index
    %c0_13 = arith.constant 0 : index
    %13 = vector.load %arg8[%c0_12, %c0_13] : memref<128x1xf32, #tpu.memory_space<vmem>>, vector<128x1xf32>
    %14 = vector.shape_cast %13 : vector<128x1xf32> to vector<128x1xf32>
    %15 = vector.broadcast %14 : vector<128x1xf32> to vector<128x384xf32>
    %c0_14 = arith.constant 0 : index
    %c0_15 = arith.constant 0 : index
    %16 = vector.load %arg9[%c0_14, %c0_15] : memref<1x1xf32, #tpu.memory_space<vmem>>, vector<1x1xf32>
    %c0_16 = arith.constant 0 : index
    %c0_17 = arith.constant 0 : index
    %17 = vector.load %arg1[%c0_16, %c0_17] : memref<2x384xf32, #tpu.memory_space<vmem>>, vector<2x384xf32>
    %18 = vector.extract_strided_slice %17 {offsets = [0, 0], sizes = [1, 384], strides = [1, 1]} : vector<2x384xf32> to vector<1x384xf32>
    %19 = vector.broadcast %0 : vector<128x1xf32> to vector<128x384xf32>
    %20 = vector.broadcast %18 : vector<1x384xf32> to vector<128x384xf32>
    %21 = arith.mulf %19, %20 : vector<128x384xf32>
    %22 = vector.extract_strided_slice %17 {offsets = [1, 0], sizes = [1, 384], strides = [1, 1]} : vector<2x384xf32> to vector<1x384xf32>
    %23 = vector.broadcast %1 : vector<128x1xf32> to vector<128x384xf32>
    %24 = vector.broadcast %22 : vector<1x384xf32> to vector<128x384xf32>
    %25 = arith.mulf %23, %24 : vector<128x384xf32>
    %26 = arith.addf %21, %25 : vector<128x384xf32>
    %27 = arith.addf %26, %4 : vector<128x384xf32>
    %28 = math.tanh %27 : vector<128x384xf32>
    %29 = arith.truncf %28 : vector<128x384xf32> to vector<128x384xbf16>
    %cst = arith.constant dense<0.000000e+00> : vector<128x384xf32>
    %30 = tpu.matmul %5, %29, %cst {dimension_numbers = #tpu.dot_dimension_numbers<[1], [0], [0], [1], [0, 0, 1, 1], [], []>} : vector<128x128xbf16>, vector<128x384xbf16>, vector<128x384xf32> -> vector<128x384xf32>
    %31 = arith.addf %30, %8 : vector<128x384xf32>
    %32 = math.tanh %31 : vector<128x384xf32>
    %33 = arith.truncf %32 : vector<128x384xf32> to vector<128x384xbf16>
    %cst_18 = arith.constant dense<0.000000e+00> : vector<128x384xf32>
    %34 = tpu.matmul %9, %33, %cst_18 {dimension_numbers = #tpu.dot_dimension_numbers<[1], [0], [0], [1], [0, 0, 1, 1], [], []>} : vector<128x128xbf16>, vector<128x384xbf16>, vector<128x384xf32> -> vector<128x384xf32>
    %35 = arith.addf %34, %12 : vector<128x384xf32>
    %36 = math.tanh %35 : vector<128x384xf32>
    %37 = arith.mulf %15, %36 : vector<128x384xf32>
    %cst_19 = arith.constant dense<0.000000e+00> : vector<384xf32>
    %38 = vector.multi_reduction <add>, %37, %cst_19 [0] : vector<128x384xf32> to vector<384xf32>
    %39 = vector.shape_cast %38 : vector<384xf32> to vector<1x384xf32>
    %40 = vector.broadcast %16 : vector<1x1xf32> to vector<1x384xf32>
    %41 = arith.addf %39, %40 : vector<1x384xf32>
    %c0_20 = arith.constant 0 : index
    %c0_21 = arith.constant 0 : index
    %42 = vector.load %arg10[%c0_20, %c0_21] : memref<1x384xf32, #tpu.memory_space<vmem>>, vector<1x384xf32>
    tpu.vector_store %arg10[%c0_20, %c0_21], %41 {strides = array<i32>} : memref<1x384xf32, #tpu.memory_space<vmem>>, vector<1x384xf32>,
    return
  }
  func.func @transform_0(%arg0: i32) -> (i32, i32) {
    %c0_i32 = arith.constant 0 : i32
    %c0_i32_0 = arith.constant 0 : i32
    return %c0_i32, %arg0 : i32, i32
  }
  func.func @transform_1(%arg0: i32) -> (i32, i32) {
    %c0_i32 = arith.constant 0 : i32
    %c0_i32_0 = arith.constant 0 : i32
    %c0_i32_1 = arith.constant 0 : i32
    return %c0_i32, %c0_i32_0 : i32, i32
  }
  func.func @transform_2(%arg0: i32) -> (i32, i32) {
    %c0_i32 = arith.constant 0 : i32
    %c0_i32_0 = arith.constant 0 : i32
    %c0_i32_1 = arith.constant 0 : i32
    return %c0_i32, %c0_i32_0 : i32, i32
  }
  func.func @transform_3(%arg0: i32) -> (i32, i32) {
    %c0_i32 = arith.constant 0 : i32
    %c0_i32_0 = arith.constant 0 : i32
    %c0_i32_1 = arith.constant 0 : i32
    return %c0_i32, %c0_i32_0 : i32, i32
  }
  func.func @transform_4(%arg0: i32) -> (i32, i32) {
    %c0_i32 = arith.constant 0 : i32
    %c0_i32_0 = arith.constant 0 : i32
    %c0_i32_1 = arith.constant 0 : i32
    return %c0_i32, %c0_i32_0 : i32, i32
  }
  func.func @transform_5(%arg0: i32) -> (i32, i32) {
    %c0_i32 = arith.constant 0 : i32
    %c0_i32_0 = arith.constant 0 : i32
    %c0_i32_1 = arith.constant 0 : i32
    return %c0_i32, %c0_i32_0 : i32, i32
  }
  func.func @transform_6(%arg0: i32) -> (i32, i32) {
    %c0_i32 = arith.constant 0 : i32
    %c0_i32_0 = arith.constant 0 : i32
    %c0_i32_1 = arith.constant 0 : i32
    return %c0_i32, %c0_i32_0 : i32, i32
  }
  func.func @transform_7(%arg0: i32) -> (i32, i32) {
    %c0_i32 = arith.constant 0 : i32
    %c0_i32_0 = arith.constant 0 : i32
    %c0_i32_1 = arith.constant 0 : i32
    return %c0_i32, %c0_i32_0 : i32, i32
  }
  func.func @transform_8(%arg0: i32) -> (i32, i32) {
    %c0_i32 = arith.constant 0 : i32
    %c0_i32_0 = arith.constant 0 : i32
    %c0_i32_1 = arith.constant 0 : i32
    return %c0_i32, %c0_i32_0 : i32, i32
  }
  func.func @transform_9(%arg0: i32) -> (i32, i32) {
    %c0_i32 = arith.constant 0 : i32
    %c0_i32_0 = arith.constant 0 : i32
    return %c0_i32, %arg0 : i32, i32
  }
}

</mosaic_0001>

<llo_original>
// kernel: pinn_forward.1
$region0: #{pinn_forward.1}
  #allocation0 [shape = 'u32[]', space=smem, size = 0x4, offset = 0x4, fixed_abs, tag = 'smem constant byte address 0x4 - core index']
  #allocation1 [shape = 'u32[144,128]{1,0:T(1,128)}', space=vmem, size = 0x12000, scoped, tag = 'internal scratch']
  #allocation2 [shape = 'f32[1,1]{1,0:T(1,128)S(1)}', space=vmem, size = 0x200, scoped, tag = 'scoped memory for pinn_forward.1']
  %s0 = inlined_call_operand.vmem [shape: f32[2,768], index: 0, kind: input, shape index: {}]
  %s1 = inlined_call_operand.vmem [shape: f32[128,2], index: 1, kind: input, shape index: {}]
  %s2 = inlined_call_operand.vmem [shape: f32[128,1], index: 2, kind: input, shape index: {}]
  %s3 = inlined_call_operand.vmem [shape: bf16[128,128], index: 3, kind: input, shape index: {}]
  %s4 = inlined_call_operand.vmem [shape: f32[128,1], index: 4, kind: input, shape index: {}]
  %s5 = inlined_call_operand.vmem [shape: bf16[128,128], index: 5, kind: input, shape index: {}]
  %s6 = inlined_call_operand.vmem [shape: f32[128,1], index: 6, kind: input, shape index: {}]
  %s7 = inlined_call_operand.vmem [shape: f32[128,1], index: 7, kind: input, shape index: {}]
  %s8 = inlined_call_operand.<no memory space> [shape: f32[1,1], index: 8, kind: input, shape index: {}]
  %s9 = inlined_call_operand.vmem [shape: f32[1,768], index: 9, kind: output, shape index: {}]
  %s10 = sld [smem:[#allocation0]]
  $region69: #{pinn_forward.1} parent=0
    _
  %s12 = ssub.s32 1, %s10
  %s13 = scalar_select 0, %s12, %s10
  %v14 = vstv %s8
  %15 = vst [vmem:[#allocation2] sm:$0x1] %v14
  loop: start=0, step=1, limit=4
  $region2: #{pinn_forward.1} parent=0 // loop_pre_header
    _
  $region3: #{pinn_forward.1} parent=0 // loop_header
    %s17 = sphi 0, %s21
    %p18 = scmp.ge.s32.totalorder %s17, 4
    %s27 = sphi 0, %s29
    %s30 = sphi 0, %s27
    %s31 = sphi 0, %s30
    %s47 = sphi 0, %s31
    %s51 = sphi 0, %s51
    %s53 = sphi 0, %s51
    %s54 = sphi 0, %s53
    %s68 = sphi 0, %s54
    %s72 = sphi 0, %s72
    %s74 = sphi 0, %s72
    %s75 = sphi 0, %s74
    %s89 = sphi 0, %s75
    %s93 = sphi 0, %s93
    %s95 = sphi 0, %s93
    %s96 = sphi 0, %s95
    %s110 = sphi 0, %s96
    %s114 = sphi 0, %s114
    %s116 = sphi 0, %s114
    %s117 = sphi 0, %s116
    %s131 = sphi 0, %s117
    %s135 = sphi 0, %s135
    %s137 = sphi 0, %s135
    %s138 = sphi 0, %s137
    %s152 = sphi 0, %s138
    %s156 = sphi 0, %s156
    %s158 = sphi 0, %s156
    %s159 = sphi 0, %s158
    %s173 = sphi 0, %s159
    %s177 = sphi 0, %s177
    %s179 = sphi 0, %s177
    %s180 = sphi 0, %s179
    %s194 = sphi 0, %s180
    %s198 = sphi 0, %s198
    %s200 = sphi 0, %s198
    %s201 = sphi 0, %s200
    %s215 = sphi 0, %s201
    %s221 = sphi 0, %s223
    %s224 = sphi 0, %s221
    %s225 = sphi 0, %s224
    %s241 = sphi 0, %s225
  $region4: #{pinn_forward.1} parent=0 // loop_header_branch
    %20 = sbr.rel (%p18) target = $region8
  $region5: #{pinn_forward.1} parent=0 // loop_body
    %s22 = ssub.s32 %s17, 1
    %s23 = ssub.s32 %s17, 2
    %s24 = sadd.s32 %s17, 1
    %s25 = ssub.s32 %s17, %s24
    %p26 = scmp.eq.s32.totalorder %s25, 0
    %s28 = sadd.s32 %s27, 1
    %s29 = scalar_select %p26, %s27, %s28
    %p32 = pneg %p26
    %p33 = scmp.eq.s32.totalorder %s17, 1
    %p34 = por %p32, %p33
    %p35 = scmp.ne.s32.totalorder %s27, %s30
    %p36 = scmp.eq.s32.totalorder %s17, 0
    %p37 = por %p35, %p36
    %p38 = scmp.ne.s32.totalorder %s27, %s30
    %p39 = scmp.eq.s32.totalorder %s22, 1
    %p40 = por %p38, %p39
    %p41 = scmp.ne.s32.totalorder %s30, %s31
    %p42 = scmp.eq.s32.totalorder %s22, 0
    %p43 = por %p41, %p42
    %p44 = scmp.ne.s32.totalorder %s30, %s31
    %p45 = scmp.eq.s32.totalorder %s23, 1
    %p46 = por %p44, %p45
    %p48 = scmp.ne.s32.totalorder %s31, %s47
    %p49 = scmp.eq.s32.totalorder %s23, 0
    %p50 = por %p48, %p49
    %s52 = sadd.s32 %s51, 1
    %p55 = scmp.eq.s32.totalorder %s17, 1
    %p56 = scmp.ne.s32.totalorder %s51, %s53
    %p57 = scmp.eq.s32.totalorder %s17, 0
    %p58 = por %p56, %p57
    %p59 = scmp.ne.s32.totalorder %s51, %s53
    %p60 = scmp.eq.s32.totalorder %s22, 1
    %p61 = por %p59, %p60
    %p62 = scmp.ne.s32.totalorder %s53, %s54
    %p63 = scmp.eq.s32.totalorder %s22, 0
    %p64 = por %p62, %p63
    %p65 = scmp.ne.s32.totalorder %s53, %s54
    %p66 = scmp.eq.s32.totalorder %s23, 1
    %p67 = por %p65, %p66
    %p69 = scmp.ne.s32.totalorder %s54, %s68
    %p70 = scmp.eq.s32.totalorder %s23, 0
    %p71 = por %p69, %p70
    %s73 = sadd.s32 %s72, 1
    %p76 = scmp.eq.s32.totalorder %s17, 1
    %p77 = scmp.ne.s32.totalorder %s72, %s74
    %p78 = scmp.eq.s32.totalorder %s17, 0
    %p79 = por %p77, %p78
    %p80 = scmp.ne.s32.totalorder %s72, %s74
    %p81 = scmp.eq.s32.totalorder %s22, 1
    %p82 = por %p80, %p81
    %p83 = scmp.ne.s32.totalorder %s74, %s75
    %p84 = scmp.eq.s32.totalorder %s22, 0
    %p85 = por %p83, %p84
    %p86 = scmp.ne.s32.totalorder %s74, %s75
    %p87 = scmp.eq.s32.totalorder %s23, 1
    %p88 = por %p86, %p87
    %p90 = scmp.ne.s32.totalorder %s75, %s89
    %p91 = scmp.eq.s32.totalorder %s23, 0
    %p92 = por %p90, %p91
    %s94 = sadd.s32 %s93, 1
    %p97 = scmp.eq.s32.totalorder %s17, 1
    %p98 = scmp.ne.s32.totalorder %s93, %s95
    %p99 = scmp.eq.s32.totalorder %s17, 0
    %p100 = por %p98, %p99
    %p101 = scmp.ne.s32.totalorder %s93, %s95
    %p102 = scmp.eq.s32.totalorder %s22, 1
    %p103 = por %p101, %p102
    %p104 = scmp.ne.s32.totalorder %s95, %s96
    %p105 = scmp.eq.s32.totalorder %s22, 0
    %p106 = por %p104, %p105
    %p107 = scmp.ne.s32.totalorder %s95, %s96
    %p108 = scmp.eq.s32.totalorder %s23, 1
    %p109 = por %p107, %p108
    %p111 = scmp.ne.s32.totalorder %s96, %s110
    %p112 = scmp.eq.s32.totalorder %s23, 0
    %p113 = por %p111, %p112
    %s115 = sadd.s32 %s114, 1
    %p118 = scmp.eq.s32.totalorder %s17, 1
    %p119 = scmp.ne.s32.totalorder %s114, %s116
    %p120 = scmp.eq.s32.totalorder %s17, 0
    %p121 = por %p119, %p120
    %p122 = scmp.ne.s32.totalorder %s114, %s116
    %p123 = scmp.eq.s32.totalorder %s22, 1
    %p124 = por %p122, %p123
    %p125 = scmp.ne.s32.totalorder %s116, %s117
    %p126 = scmp.eq.s32.totalorder %s22, 0
    %p127 = por %p125, %p126
    %p128 = scmp.ne.s32.totalorder %s116, %s117
    %p129 = scmp.eq.s32.totalorder %s23, 1
    %p130 = por %p128, %p129
    %p132 = scmp.ne.s32.totalorder %s117, %s131
    %p133 = scmp.eq.s32.totalorder %s23, 0
    %p134 = por %p132, %p133
    %s136 = sadd.s32 %s135, 1
    %p139 = scmp.eq.s32.totalorder %s17, 1
    %p140 = scmp.ne.s32.totalorder %s135, %s137
    %p141 = scmp.eq.s32.totalorder %s17, 0
    %p142 = por %p140, %p141
    %p143 = scmp.ne.s32.totalorder %s135, %s137
    %p144 = scmp.eq.s32.totalorder %s22, 1
    %p145 = por %p143, %p144
    %p146 = scmp.ne.s32.totalorder %s137, %s138
    %p147 = scmp.eq.s32.totalorder %s22, 0
    %p148 = por %p146, %p147
    %p149 = scmp.ne.s32.totalorder %s137, %s138
    %p150 = scmp.eq.s32.totalorder %s23, 1
    %p151 = por %p149, %p150
    %p153 = scmp.ne.s32.totalorder %s138, %s152
    %p154 = scmp.eq.s32.totalorder %s23, 0
    %p155 = por %p153, %p154
    %s157 = sadd.s32 %s156, 1
    %p160 = scmp.eq.s32.totalorder %s17, 1
    %p161 = scmp.ne.s32.totalorder %s156, %s158
    %p162 = scmp.eq.s32.totalorder %s17, 0
    %p163 = por %p161, %p162
    %p164 = scmp.ne.s32.totalorder %s156, %s158
    %p165 = scmp.eq.s32.totalorder %s22, 1
    %p166 = por %p164, %p165
    %p167 = scmp.ne.s32.totalorder %s158, %s159
    %p168 = scmp.eq.s32.totalorder %s22, 0
    %p169 = por %p167, %p168
    %p170 = scmp.ne.s32.totalorder %s158, %s159
    %p171 = scmp.eq.s32.totalorder %s23, 1
    %p172 = por %p170, %p171
    %p174 = scmp.ne.s32.totalorder %s159, %s173
    %p175 = scmp.eq.s32.totalorder %s23, 0
    %p176 = por %p174, %p175
    %s178 = sadd.s32 %s177, 1
    %p181 = scmp.eq.s32.totalorder %s17, 1
    %p182 = scmp.ne.s32.totalorder %s177, %s179
    %p183 = scmp.eq.s32.totalorder %s17, 0
    %p184 = por %p182, %p183
    %p185 = scmp.ne.s32.totalorder %s177, %s179
    %p186 = scmp.eq.s32.totalorder %s22, 1
    %p187 = por %p185, %p186
    %p188 = scmp.ne.s32.totalorder %s179, %s180
    %p189 = scmp.eq.s32.totalorder %s22, 0
    %p190 = por %p188, %p189
    %p191 = scmp.ne.s32.totalorder %s179, %s180
    %p192 = scmp.eq.s32.totalorder %s23, 1
    %p193 = por %p191, %p192
    %p195 = scmp.ne.s32.totalorder %s180, %s194
    %p196 = scmp.eq.s32.totalorder %s23, 0
    %p197 = por %p195, %p196
    %s199 = sadd.s32 %s198, 1
    %p202 = scmp.eq.s32.totalorder %s17, 1
    %p203 = scmp.ne.s32.totalorder %s198, %s200
    %p204 = scmp.eq.s32.totalorder %s17, 0
    %p205 = por %p203, %p204
    %p206 = scmp.ne.s32.totalorder %s198, %s200
    %p207 = scmp.eq.s32.totalorder %s22, 1
    %p208 = por %p206, %p207
    %p209 = scmp.ne.s32.totalorder %s200, %s201
    %p210 = scmp.eq.s32.totalorder %s22, 0
    %p211 = por %p209, %p210
    %p212 = scmp.ne.s32.totalorder %s200, %s201
    %p213 = scmp.eq.s32.totalorder %s23, 1
    %p214 = por %p212, %p213
    %p216 = scmp.ne.s32.totalorder %s201, %s215
    %p217 = scmp.eq.s32.totalorder %s23, 0
    %p218 = por %p216, %p217
    %s219 = ssub.s32 %s17, %s24
    %p220 = scmp.eq.s32.totalorder %s219, 0
    %s222 = sadd.s32 %s221, 1
    %s223 = scalar_select %p220, %s221, %s222
    %p226 = pneg %p220
    %p227 = scmp.eq.s32.totalorder %s17, 1
    %p228 = por %p226, %p227
    %p229 = scmp.ne.s32.totalorder %s221, %s224
    %p230 = scmp.eq.s32.totalorder %s17, 0
    %p231 = por %p229, %p230
    %p232 = scmp.ne.s32.totalorder %s221, %s224
    %p233 = scmp.eq.s32.totalorder %s22, 1
    %p234 = por %p232, %p233
    %p235 = scmp.ne.s32.totalorder %s224, %s225
    %p236 = scmp.eq.s32.totalorder %s22, 0
    %p237 = por %p235, %p236
    %p238 = scmp.ne.s32.totalorder %s224, %s225
    %p239 = scmp.eq.s32.totalorder %s23, 1
    %p240 = por %p238, %p239
    %p242 = scmp.ne.s32.totalorder %s225, %s241
    %p243 = scmp.eq.s32.totalorder %s23, 0
    %p244 = por %p242, %p243
    %p245 = scmp.le.s32.totalorder 1, %s17
    %p246 = scmp.lt.s32.totalorder %s17, 3
    %p247 = pnand %p245, %p246
    %p248 = pneg %p247
    // Predicated region
    $region9: #{pinn_forward.1} parent=5 // pred_check
      _
    $region10: #{pinn_forward.1} parent=5 // pred_check_branch
      %250 = sbr.rel (%p247) target = $region12
    $region11: #{pinn_forward.1} parent=5 // pred_region
      %s251 = ssub.s32 %s17, 1
      // Predicated region
      $region13: #{pinn_forward.1} parent=11 // pred_check
        %p252 = pneg %p64
      $region14: #{pinn_forward.1} parent=11 // pred_check_branch
        %254 = sbr.rel (%p252) target = $region16
      $region15: #{pinn_forward.1} parent=11 // pred_region
        _
      $region16: #{pinn_forward.1} parent=11 // pred_fallthru
        _
      // Predicated region
      $region17: #{pinn_forward.1} parent=11 // pred_check
        %p255 = pneg %p85
      $region18: #{pinn_forward.1} parent=11 // pred_check_branch
        %257 = sbr.rel (%p255) target = $region20
      $region19: #{pinn_forward.1} parent=11 // pred_region
        _
      $region20: #{pinn_forward.1} parent=11 // pred_fallthru
        _
      // Predicated region
      $region21: #{pinn_forward.1} parent=11 // pred_check
        %p258 = pneg %p106
      $region22: #{pinn_forward.1} parent=11 // pred_check_branch
        %260 = sbr.rel (%p258) target = $region24
      $region23: #{pinn_forward.1} parent=11 // pred_region
        _
      $region24: #{pinn_forward.1} parent=11 // pred_fallthru
        _
      // Predicated region
      $region25: #{pinn_forward.1} parent=11 // pred_check
        %p261 = pneg %p127
      $region26: #{pinn_forward.1} parent=11 // pred_check_branch
        %263 = sbr.rel (%p261) target = $region28
      $region27: #{pinn_forward.1} parent=11 // pred_region
        _
      $region28: #{pinn_forward.1} parent=11 // pred_fallthru
        _
      // Predicated region
      $region29: #{pinn_forward.1} parent=11 // pred_check
        %p264 = pneg %p148
      $region30: #{pinn_forward.1} parent=11 // pred_check_branch
        %266 = sbr.rel (%p264) target = $region32
      $region31: #{pinn_forward.1} parent=11 // pred_region
        _
      $region32: #{pinn_forward.1} parent=11 // pred_fallthru
        _
      // Predicated region
      $region33: #{pinn_forward.1} parent=11 // pred_check
        %p267 = pneg %p169
      $region34: #{pinn_forward.1} parent=11 // pred_check_branch
        %269 = sbr.rel (%p267) target = $region36
      $region35: #{pinn_forward.1} parent=11 // pred_region
        _
      $region36: #{pinn_forward.1} parent=11 // pred_fallthru
        _
      // Predicated region
      $region37: #{pinn_forward.1} parent=11 // pred_check
        %p270 = pneg %p190
      $region38: #{pinn_forward.1} parent=11 // pred_check_branch
        %272 = sbr.rel (%p270) target = $region40
      $region39: #{pinn_forward.1} parent=11 // pred_region
        _
      $region40: #{pinn_forward.1} parent=11 // pred_fallthru
        _
      // Predicated region
      $region41: #{pinn_forward.1} parent=11 // pred_check
        %p273 = pneg %p211
      $region42: #{pinn_forward.1} parent=11 // pred_check_branch
        %275 = sbr.rel (%p273) target = $region44
      $region43: #{pinn_forward.1} parent=11 // pred_region
        _
      $region44: #{pinn_forward.1} parent=11 // pred_fallthru
        _
    $region12: #{pinn_forward.1} parent=5 // pred_fallthru
      _
    %p276 = scmp.lt.s32.totalorder %s17, 2
    // Predicated region
    $region45: #{pinn_forward.1} parent=5 // pred_check
      %p277 = pneg %p276
    $region46: #{pinn_forward.1} parent=5 // pred_check_branch
      %279 = sbr.rel (%p277) target = $region48
    $region47: #{pinn_forward.1} parent=5 // pred_region
      // Predicated region
      $region49: #{pinn_forward.1} parent=47 // pred_check
        %p280 = pneg %p37
      $region50: #{pinn_forward.1} parent=47 // pred_check_branch
        %282 = sbr.rel (%p280) target = $region52
      $region51: #{pinn_forward.1} parent=47 // pred_region
        %s283 = smul.u32 3, %s17
        %p284 = scmp.lt.s32.totalorder %s283, 5
        %s285 = scalar_select %p284, %s283, 5
        %s286 = smul.addr %s285, 2
        %s287 = scalar_lea.vmem %s0, %s286
        %s288 = smul.u32 3, %s17
      $region52: #{pinn_forward.1} parent=47 // pred_fallthru
        _
    $region48: #{pinn_forward.1} parent=5 // pred_fallthru
      _
    %p289 = scmp.le.s32.totalorder 1, %s17
    %p290 = scmp.lt.s32.totalorder %s17, 3
    %p291 = pnand %p289, %p290
    %p292 = pneg %p291
    // Predicated region
    $region53: #{pinn_forward.1} parent=5 // pred_check
      _
    $region54: #{pinn_forward.1} parent=5 // pred_check_branch
      %294 = sbr.rel (%p291) target = $region56
    $region55: #{pinn_forward.1} parent=5 // pred_region
      %s295 = ssub.s32 %s17, 1
      %s296 = smul.u32 3, %s22
      %p297 = scmp.lt.s32.totalorder %s296, 5
      %s298 = scalar_select %p297, %s296, 5
      %s299 = smul.addr %s298, 2
      %s300 = scalar_lea.vmem %s0, %s299
      %p301 = pneg %p43
      %p302 = pneg %p40
      %p303 = pneg %p64
      %p304 = pneg %p61
      %p305 = pneg %p85
      %p306 = pneg %p82
      %p307 = pneg %p106
      %p308 = pneg %p103
      %p309 = pneg %p127
      %p310 = pneg %p124
      %p311 = pneg %p148
      %p312 = pneg %p145
      %p313 = pneg %p169
      %p314 = pneg %p166
      %p315 = pneg %p190
      %p316 = pneg %p187
      %p317 = pneg %p211
      %p318 = pneg %p208
      %p319 = pneg %p237
      %p320 = pneg %p234
      %s321 = smul.u32 3, %s22
      %p322 = scmp.lt.s32.totalorder %s321, 5
      %s323 = scalar_select %p322, %s321, 5
      %s324 = scalar_lea.vmem %s9, %s323
      %s325 = smul.u32 3, %s22
      %p326 = scmp.lt.s32.totalorder %s325, 5
      %s327 = scalar_select %p326, %s325, 5
      %s328 = smul.addr %s327, 2
      %s329 = scalar_lea.vmem %s0, %s328
      %s330 = smul.u32 3, %s22
      %s331 = smul.u32 3, %s22
      %p332 = scmp.lt.s32.totalorder %s331, 5
      %s333 = scalar_select %p332, %s331, 5
      %s334 = scalar_lea.vmem %s9, %s333
      %s335 = smul.u32 3, %s22
      %v337 = vld [vmem:[%s1] sm:$0xff]
      %v338 = vld [vmem:[%s1 + $0x8] sm:$0xff]
      %v339 = vld [vmem:[%s1 + $0x10] sm:$0xff]
      %v340 = vld [vmem:[%s1 + $0x18] sm:$0xff]
      %v341 = vld [vmem:[%s1 + $0x20] sm:$0xff]
      %v342 = vld [vmem:[%s1 + $0x28] sm:$0xff]
      %v343 = vld [vmem:[%s1 + $0x30] sm:$0xff]
      %v344 = vld [vmem:[%s1 + $0x38] sm:$0xff]
      %v345 = vld [vmem:[%s1 + $0x40] sm:$0xff]
      %v346 = vld [vmem:[%s1 + $0x48] sm:$0xff]
      %v347 = vld [vmem:[%s1 + $0x50] sm:$0xff]
      %v348 = vld [vmem:[%s1 + $0x58] sm:$0xff]
      %v349 = vld [vmem:[%s1 + $0x60] sm:$0xff]
      %v350 = vld [vmem:[%s1 + $0x68] sm:$0xff]
      %v351 = vld [vmem:[%s1 + $0x70] sm:$0xff]
      %v352 = vld [vmem:[%s1 + $0x78] sm:$0xff]
      %v353 = vld [vmem:[%s2] sm:$0xff]
      %v354 = vld [vmem:[%s2 + $0x8] sm:$0xff]
      %v355 = vld [vmem:[%s2 + $0x10] sm:$0xff]
      %v356 = vld [vmem:[%s2 + $0x18] sm:$0xff]
      %v357 = vld [vmem:[%s2 + $0x20] sm:$0xff]
      %v358 = vld [vmem:[%s2 + $0x28] sm:$0xff]
      %v359 = vld [vmem:[%s2 + $0x30] sm:$0xff]
      %v360 = vld [vmem:[%s2 + $0x38] sm:$0xff]
      %v361 = vld [vmem:[%s2 + $0x40] sm:$0xff]
      %v362 = vld [vmem:[%s2 + $0x48] sm:$0xff]
      %v363 = vld [vmem:[%s2 + $0x50] sm:$0xff]
      %v364 = vld [vmem:[%s2 + $0x58] sm:$0xff]
      %v365 = vld [vmem:[%s2 + $0x60] sm:$0xff]
      %v366 = vld [vmem:[%s2 + $0x68] sm:$0xff]
      %v367 = vld [vmem:[%s2 + $0x70] sm:$0xff]
      %v368 = vld [vmem:[%s2 + $0x78] sm:$0xff]
      %370 = vset.pattern.permute.xlu0 0
      %371 = vperm.xlu0 %370, %v353
      %v372 = vpop.permute.xlu0 %371
      %375 = vset.pattern.permute.xlu0 0
      %376 = vperm.xlu0 %375, %v354
      %v377 = vpop.permute.xlu0 %376
      %380 = vset.pattern.permute.xlu0 0
      %381 = vperm.xlu0 %380, %v355
      %v382 = vpop.permute.xlu0 %381
      %385 = vset.pattern.permute.xlu0 0
      %386 = vperm.xlu0 %385, %v356
      %v387 = vpop.permute.xlu0 %386
      %390 = vset.pattern.permute.xlu0 0
      %391 = vperm.xlu0 %390, %v357
      %v392 = vpop.permute.xlu0 %391
      %395 = vset.pattern.permute.xlu0 0
      %396 = vperm.xlu0 %395, %v358
      %v397 = vpop.permute.xlu0 %396
      %400 = vset.pattern.permute.xlu0 0
      %401 = vperm.xlu0 %400, %v359
      %v402 = vpop.permute.xlu0 %401
      %405 = vset.pattern.permute.xlu0 0
      %406 = vperm.xlu0 %405, %v360
      %v407 = vpop.permute.xlu0 %406
      %410 = vset.pattern.permute.xlu0 0
      %411 = vperm.xlu0 %410, %v361
      %v412 = vpop.permute.xlu0 %411
      %415 = vset.pattern.permute.xlu0 0
      %416 = vperm.xlu0 %415, %v362
      %v417 = vpop.permute.xlu0 %416
      %420 = vset.pattern.permute.xlu0 0
      %421 = vperm.xlu0 %420, %v363
      %v422 = vpop.permute.xlu0 %421
      %425 = vset.pattern.permute.xlu0 0
      %426 = vperm.xlu0 %425, %v364
      %v427 = vpop.permute.xlu0 %426
      %430 = vset.pattern.permute.xlu0 0
      %431 = vperm.xlu0 %430, %v365
      %v432 = vpop.permute.xlu0 %431
      %435 = vset.pattern.permute.xlu0 0
      %436 = vperm.xlu0 %435, %v366
      %v437 = vpop.permute.xlu0 %436
      %440 = vset.pattern.permute.xlu0 0
      %441 = vperm.xlu0 %440, %v367
      %v442 = vpop.permute.xlu0 %441
      %445 = vset.pattern.permute.xlu0 0
      %446 = vperm.xlu0 %445, %v368
      %v447 = vpop.permute.xlu0 %446
      %v449 = vld [vmem:[%s3] sm:$0xf]
      %v450 = vld [vmem:[%s3 + $0x4] sm:$0xf]
      %v451 = vld [vmem:[%s3 + $0x8] sm:$0xf]
      %v452 = vld [vmem:[%s3 + $0xc] sm:$0xf]
      %v453 = vld [vmem:[%s3 + $0x10] sm:$0xf]
      %v454 = vld [vmem:[%s3 + $0x14] sm:$0xf]
      %v455 = vld [vmem:[%s3 + $0x18] sm:$0xf]
      %v456 = vld [vmem:[%s3 + $0x1c] sm:$0xf]
      %v457 = vld [vmem:[%s3 + $0x20] sm:$0xf]
      %v458 = vld [vmem:[%s3 + $0x24] sm:$0xf]
      %v459 = vld [vmem:[%s3 + $0x28] sm:$0xf]
      %v460 = vld [vmem:[%s3 + $0x2c] sm:$0xf]
      %v461 = vld [vmem:[%s3 + $0x30] sm:$0xf]
      %v462 = vld [vmem:[%s3 + $0x34] sm:$0xf]
      %v463 = vld [vmem:[%s3 + $0x38] sm:$0xf]
      %v464 = vld [vmem:[%s3 + $0x3c] sm:$0xf]
      %v465 = vld [vmem:[%s4] sm:$0xff]
      %v466 = vld [vmem:[%s4 + $0x8] sm:$0xff]
      %v467 = vld [vmem:[%s4 + $0x10] sm:$0xff]
      %v468 = vld [vmem:[%s4 + $0x18] sm:$0xff]
      %v469 = vld [vmem:[%s4 + $0x20] sm:$0xff]
      %v470 = vld [vmem:[%s4 + $0x28] sm:$0xff]
      %v471 = vld [vmem:[%s4 + $0x30] sm:$0xff]
      %v472 = vld [vmem:[%s4 + $0x38] sm:$0xff]
      %v473 = vld [vmem:[%s4 + $0x40] sm:$0xff]
      %v474 = vld [vmem:[%s4 + $0x48] sm:$0xff]
      %v475 = vld [vmem:[%s4 + $0x50] sm:$0xff]
      %v476 = vld [vmem:[%s4 + $0x58] sm:$0xff]
      %v477 = vld [vmem:[%s4 + $0x60] sm:$0xff]
      %v478 = vld [vmem:[%s4 + $0x68] sm:$0xff]
      %v479 = vld [vmem:[%s4 + $0x70] sm:$0xff]
      %v480 = vld [vmem:[%s4 + $0x78] sm:$0xff]
      %482 = vset.pattern.permute.xlu0 0
      %483 = vperm.xlu0 %482, %v465
      %v484 = vpop.permute.xlu0 %483
      %487 = vset.pattern.permute.xlu0 0
      %488 = vperm.xlu0 %487, %v466
      %v489 = vpop.permute.xlu0 %488
      %492 = vset.pattern.permute.xlu0 0
      %493 = vperm.xlu0 %492, %v467
      %v494 = vpop.permute.xlu0 %493
      %497 = vset.pattern.permute.xlu0 0
      %498 = vperm.xlu0 %497, %v468
      %v499 = vpop.permute.xlu0 %498
      %502 = vset.pattern.permute.xlu0 0
      %503 = vperm.xlu0 %502, %v469
      %v504 = vpop.permute.xlu0 %503
      %507 = vset.pattern.permute.xlu0 0
      %508 = vperm.xlu0 %507, %v470
      %v509 = vpop.permute.xlu0 %508
      %512 = vset.pattern.permute.xlu0 0
      %513 = vperm.xlu0 %512, %v471
      %v514 = vpop.permute.xlu0 %513
      %517 = vset.pattern.permute.xlu0 0
      %518 = vperm.xlu0 %517, %v472
      %v519 = vpop.permute.xlu0 %518
      %522 = vset.pattern.permute.xlu0 0
      %523 = vperm.xlu0 %522, %v473
      %v524 = vpop.permute.xlu0 %523
      %527 = vset.pattern.permute.xlu0 0
      %528 = vperm.xlu0 %527, %v474
      %v529 = vpop.permute.xlu0 %528
      %532 = vset.pattern.permute.xlu0 0
      %533 = vperm.xlu0 %532, %v475
      %v534 = vpop.permute.xlu0 %533
      %537 = vset.pattern.permute.xlu0 0
      %538 = vperm.xlu0 %537, %v476
      %v539 = vpop.permute.xlu0 %538
      %542 = vset.pattern.permute.xlu0 0
      %543 = vperm.xlu0 %542, %v477
      %v544 = vpop.permute.xlu0 %543
      %547 = vset.pattern.permute.xlu0 0
      %548 = vperm.xlu0 %547, %v478
      %v549 = vpop.permute.xlu0 %548
      %552 = vset.pattern.permute.xlu0 0
      %553 = vperm.xlu0 %552, %v479
      %v554 = vpop.permute.xlu0 %553
      %557 = vset.pattern.permute.xlu0 0
      %558 = vperm.xlu0 %557, %v480
      %v559 = vpop.permute.xlu0 %558
      %v561 = vld [vmem:[%s5] sm:$0xf]
      %v562 = vld [vmem:[%s5 + $0x4] sm:$0xf]
      %v563 = vld [vmem:[%s5 + $0x8] sm:$0xf]
      %v564 = vld [vmem:[%s5 + $0xc] sm:$0xf]
      %v565 = vld [vmem:[%s5 + $0x10] sm:$0xf]
      %v566 = vld [vmem:[%s5 + $0x14] sm:$0xf]
      %v567 = vld [vmem:[%s5 + $0x18] sm:$0xf]
      %v568 = vld [vmem:[%s5 + $0x1c] sm:$0xf]
      %v569 = vld [vmem:[%s5 + $0x20] sm:$0xf]
      %v570 = vld [vmem:[%s5 + $0x24] sm:$0xf]
      %v571 = vld [vmem:[%s5 + $0x28] sm:$0xf]
      %v572 = vld [vmem:[%s5 + $0x2c] sm:$0xf]
      %v573 = vld [vmem:[%s5 + $0x30] sm:$0xf]
      %v574 = vld [vmem:[%s5 + $0x34] sm:$0xf]
      %v575 = vld [vmem:[%s5 + $0x38] sm:$0xf]
      %v576 = vld [vmem:[%s5 + $0x3c] sm:$0xf]
      %v577 = vld [vmem:[%s6] sm:$0xff]
      %v578 = vld [vmem:[%s6 + $0x8] sm:$0xff]
      %v579 = vld [vmem:[%s6 + $0x10] sm:$0xff]
      %v580 = vld [vmem:[%s6 + $0x18] sm:$0xff]
      %v581 = vld [vmem:[%s6 + $0x20] sm:$0xff]
      %v582 = vld [vmem:[%s6 + $0x28] sm:$0xff]
      %v583 = vld [vmem:[%s6 + $0x30] sm:$0xff]
      %v584 = vld [vmem:[%s6 + $0x38] sm:$0xff]
      %v585 = vld [vmem:[%s6 + $0x40] sm:$0xff]
      %v586 = vld [vmem:[%s6 + $0x48] sm:$0xff]
      %v587 = vld [vmem:[%s6 + $0x50] sm:$0xff]
      %v588 = vld [vmem:[%s6 + $0x58] sm:$0xff]
      %v589 = vld [vmem:[%s6 + $0x60] sm:$0xff]
      %v590 = vld [vmem:[%s6 + $0x68] sm:$0xff]
      %v591 = vld [vmem:[%s6 + $0x70] sm:$0xff]
      %v592 = vld [vmem:[%s6 + $0x78] sm:$0xff]
      %594 = vset.pattern.permute.xlu0 0
      %595 = vperm.xlu0 %594, %v577
      %v596 = vpop.permute.xlu0 %595
      %599 = vset.pattern.permute.xlu0 0
      %600 = vperm.xlu0 %599, %v578
      %v601 = vpop.permute.xlu0 %600
      %604 = vset.pattern.permute.xlu0 0
      %605 = vperm.xlu0 %604, %v579
      %v606 = vpop.permute.xlu0 %605
      %609 = vset.pattern.permute.xlu0 0
      %610 = vperm.xlu0 %609, %v580
      %v611 = vpop.permute.xlu0 %610
      %614 = vset.pattern.permute.xlu0 0
      %615 = vperm.xlu0 %614, %v581
      %v616 = vpop.permute.xlu0 %615
      %619 = vset.pattern.permute.xlu0 0
      %620 = vperm.xlu0 %619, %v582
      %v621 = vpop.permute.xlu0 %620
      %624 = vset.pattern.permute.xlu0 0
      %625 = vperm.xlu0 %624, %v583
      %v626 = vpop.permute.xlu0 %625
      %629 = vset.pattern.permute.xlu0 0
      %630 = vperm.xlu0 %629, %v584
      %v631 = vpop.permute.xlu0 %630
      %634 = vset.pattern.permute.xlu0 0
      %635 = vperm.xlu0 %634, %v585
      %v636 = vpop.permute.xlu0 %635
      %639 = vset.pattern.permute.xlu0 0
      %640 = vperm.xlu0 %639, %v586
      %v641 = vpop.permute.xlu0 %640
      %644 = vset.pattern.permute.xlu0 0
      %645 = vperm.xlu0 %644, %v587
      %v646 = vpop.permute.xlu0 %645
      %649 = vset.pattern.permute.xlu0 0
      %650 = vperm.xlu0 %649, %v588
      %v651 = vpop.permute.xlu0 %650
      %654 = vset.pattern.permute.xlu0 0
      %655 = vperm.xlu0 %654, %v589
      %v656 = vpop.permute.xlu0 %655
      %659 = vset.pattern.permute.xlu0 0
      %660 = vperm.xlu0 %659, %v590
      %v661 = vpop.permute.xlu0 %660
      %664 = vset.pattern.permute.xlu0 0
      %665 = vperm.xlu0 %664, %v591
      %v666 = vpop.permute.xlu0 %665
      %669 = vset.pattern.permute.xlu0 0
      %670 = vperm.xlu0 %669, %v592
      %v671 = vpop.permute.xlu0 %670
      %v673 = vld [vmem:[%s7] sm:$0xff]
      %v674 = vld [vmem:[%s7 + $0x8] sm:$0xff]
      %v675 = vld [vmem:[%s7 + $0x10] sm:$0xff]
      %v676 = vld [vmem:[%s7 + $0x18] sm:$0xff]
      %v677 = vld [vmem:[%s7 + $0x20] sm:$0xff]
      %v678 = vld [vmem:[%s7 + $0x28] sm:$0xff]
      %v679 = vld [vmem:[%s7 + $0x30] sm:$0xff]
      %v680 = vld [vmem:[%s7 + $0x38] sm:$0xff]
      %v681 = vld [vmem:[%s7 + $0x40] sm:$0xff]
      %v682 = vld [vmem:[%s7 + $0x48] sm:$0xff]
      %v683 = vld [vmem:[%s7 + $0x50] sm:$0xff]
      %v684 = vld [vmem:[%s7 + $0x58] sm:$0xff]
      %v685 = vld [vmem:[%s7 + $0x60] sm:$0xff]
      %v686 = vld [vmem:[%s7 + $0x68] sm:$0xff]
      %v687 = vld [vmem:[%s7 + $0x70] sm:$0xff]
      %v688 = vld [vmem:[%s7 + $0x78] sm:$0xff]
      %690 = vset.pattern.permute.xlu0 0
      %691 = vperm.xlu0 %690, %v673
      %v692 = vpop.permute.xlu0 %691
      %695 = vset.pattern.permute.xlu0 0
      %696 = vperm.xlu0 %695, %v674
      %v697 = vpop.permute.xlu0 %696
      %700 = vset.pattern.permute.xlu0 0
      %701 = vperm.xlu0 %700, %v675
      %v702 = vpop.permute.xlu0 %701
      %705 = vset.pattern.permute.xlu0 0
      %706 = vperm.xlu0 %705, %v676
      %v707 = vpop.permute.xlu0 %706
      %710 = vset.pattern.permute.xlu0 0
      %711 = vperm.xlu0 %710, %v677
      %v712 = vpop.permute.xlu0 %711
      %715 = vset.pattern.permute.xlu0 0
      %716 = vperm.xlu0 %715, %v678
      %v717 = vpop.permute.xlu0 %716
      %720 = vset.pattern.permute.xlu0 0
      %721 = vperm.xlu0 %720, %v679
      %v722 = vpop.permute.xlu0 %721
      %725 = vset.pattern.permute.xlu0 0
      %726 = vperm.xlu0 %725, %v680
      %v727 = vpop.permute.xlu0 %726
      %730 = vset.pattern.permute.xlu0 0
      %731 = vperm.xlu0 %730, %v681
      %v732 = vpop.permute.xlu0 %731
      %735 = vset.pattern.permute.xlu0 0
      %736 = vperm.xlu0 %735, %v682
      %v737 = vpop.permute.xlu0 %736
      %740 = vset.pattern.permute.xlu0 0
      %741 = vperm.xlu0 %740, %v683
      %v742 = vpop.permute.xlu0 %741
      %745 = vset.pattern.permute.xlu0 0
      %746 = vperm.xlu0 %745, %v684
      %v747 = vpop.permute.xlu0 %746
      %750 = vset.pattern.permute.xlu0 0
      %751 = vperm.xlu0 %750, %v685
      %v752 = vpop.permute.xlu0 %751
      %755 = vset.pattern.permute.xlu0 0
      %756 = vperm.xlu0 %755, %v686
      %v757 = vpop.permute.xlu0 %756
      %760 = vset.pattern.permute.xlu0 0
      %761 = vperm.xlu0 %760, %v687
      %v762 = vpop.permute.xlu0 %761
      %765 = vset.pattern.permute.xlu0 0
      %766 = vperm.xlu0 %765, %v688
      %v767 = vpop.permute.xlu0 %766
      %v769 = vld [vmem:[#allocation2] sm:$0x1]
      %v770 = vld [vmem:[%s329] sm:$0x3f]
      %772 = vset.pattern.permute.xlu0 0
      %773 = vperm.xlu0 %772, %v337
      %v774 = vpop.permute.xlu0 %773
      %777 = vset.pattern.permute.xlu0 0
      %778 = vperm.xlu0 %777, %v338
      %v779 = vpop.permute.xlu0 %778
      %782 = vset.pattern.permute.xlu0 0
      %783 = vperm.xlu0 %782, %v339
      %v784 = vpop.permute.xlu0 %783
      %787 = vset.pattern.permute.xlu0 0
      %788 = vperm.xlu0 %787, %v340
      %v789 = vpop.permute.xlu0 %788
      %792 = vset.pattern.permute.xlu0 0
      %793 = vperm.xlu0 %792, %v341
      %v794 = vpop.permute.xlu0 %793
      %797 = vset.pattern.permute.xlu0 0
      %798 = vperm.xlu0 %797, %v342
      %v799 = vpop.permute.xlu0 %798
      %802 = vset.pattern.permute.xlu0 0
      %803 = vperm.xlu0 %802, %v343
      %v804 = vpop.permute.xlu0 %803
      %807 = vset.pattern.permute.xlu0 0
      %808 = vperm.xlu0 %807, %v344
      %v809 = vpop.permute.xlu0 %808
      %812 = vset.pattern.permute.xlu0 0
      %813 = vperm.xlu0 %812, %v345
      %v814 = vpop.permute.xlu0 %813
      %817 = vset.pattern.permute.xlu0 0
      %818 = vperm.xlu0 %817, %v346
      %v819 = vpop.permute.xlu0 %818
      %822 = vset.pattern.permute.xlu0 0
      %823 = vperm.xlu0 %822, %v347
      %v824 = vpop.permute.xlu0 %823
      %827 = vset.pattern.permute.xlu0 0
      %828 = vperm.xlu0 %827, %v348
      %v829 = vpop.permute.xlu0 %828
      %832 = vset.pattern.permute.xlu0 0
      %833 = vperm.xlu0 %832, %v349
      %v834 = vpop.permute.xlu0 %833
      %837 = vset.pattern.permute.xlu0 0
      %838 = vperm.xlu0 %837, %v350
      %v839 = vpop.permute.xlu0 %838
      %842 = vset.pattern.permute.xlu0 0
      %843 = vperm.xlu0 %842, %v351
      %v844 = vpop.permute.xlu0 %843
      %847 = vset.pattern.permute.xlu0 0
      %848 = vperm.xlu0 %847, %v352
      %v849 = vpop.permute.xlu0 %848
      %v852 = vlaneseq
      %v853 = vshrl.u32 %v852, 7
      %v854 = vsub.s32 0, %v853
      %v855 = vrot.slane %v770, %v854
      %v856 = vlaneseq
      %v857 = vshrl.u32 %v856, 7
      %v858 = vsub.s32 2, %v857
      %v859 = vrot.slane %v770, %v858
      %v860 = vlaneseq
      %v861 = vshrl.u32 %v860, 7
      %v862 = vsub.s32 4, %v861
      %v863 = vrot.slane %v770, %v862
      %v867 = vlaneseq
      %v868 = vshrl.u32 %v867, 7
      %v869 = vsub.s32 0, %v868
      %v870 = vrot.slane %v855, %v869
      %v871 = vlaneseq
      %v872 = vshrl.u32 %v871, 7
      %v873 = vsub.s32 0, %v872
      %v874 = vrot.slane %v859, %v873
      %v875 = vlaneseq
      %v876 = vshrl.u32 %v875, 7
      %v877 = vsub.s32 0, %v876
      %v878 = vrot.slane %v863, %v877
      %v879 = vmul.f32 %v774, %v870
      %v880 = vmul.f32 %v774, %v874
      %v881 = vmul.f32 %v774, %v878
      %v882 = vmul.f32 %v779, %v870
      %v883 = vmul.f32 %v779, %v874
      %v884 = vmul.f32 %v779, %v878
      %v885 = vmul.f32 %v784, %v870
      %v886 = vmul.f32 %v784, %v874
      %v887 = vmul.f32 %v784, %v878
      %v888 = vmul.f32 %v789, %v870
      %v889 = vmul.f32 %v789, %v874
      %v890 = vmul.f32 %v789, %v878
      %v891 = vmul.f32 %v794, %v870
      %v892 = vmul.f32 %v794, %v874
      %v893 = vmul.f32 %v794, %v878
      %v894 = vmul.f32 %v799, %v870
      %v895 = vmul.f32 %v799, %v874
      %v896 = vmul.f32 %v799, %v878
      %v897 = vmul.f32 %v804, %v870
      %v898 = vmul.f32 %v804, %v874
      %v899 = vmul.f32 %v804, %v878
      %v900 = vmul.f32 %v809, %v870
      %v901 = vmul.f32 %v809, %v874
      %v902 = vmul.f32 %v809, %v878
      %v903 = vmul.f32 %v814, %v870
      %v904 = vmul.f32 %v814, %v874
      %v905 = vmul.f32 %v814, %v878
      %v906 = vmul.f32 %v819, %v870
      %v907 = vmul.f32 %v819, %v874
      %v908 = vmul.f32 %v819, %v878
      %v909 = vmul.f32 %v824, %v870
      %v910 = vmul.f32 %v824, %v874
      %v911 = vmul.f32 %v824, %v878
      %v912 = vmul.f32 %v829, %v870
      %v913 = vmul.f32 %v829, %v874
      %v914 = vmul.f32 %v829, %v878
      %v915 = vmul.f32 %v834, %v870
      %v916 = vmul.f32 %v834, %v874
      %v917 = vmul.f32 %v834, %v878
      %v918 = vmul.f32 %v839, %v870
      %v919 = vmul.f32 %v839, %v874
      %v920 = vmul.f32 %v839, %v878
      %v921 = vmul.f32 %v844, %v870
      %v922 = vmul.f32 %v844, %v874
      %v923 = vmul.f32 %v844, %v878
      %v924 = vmul.f32 %v849, %v870
      %v925 = vmul.f32 %v849, %v874
      %v926 = vmul.f32 %v849, %v878
      %927 = vset.pattern.permute.xlu0 1
      %928 = vperm.xlu0 %927, %v337
      %v929 = vpop.permute.xlu0 %928
      %931 = vset.pattern.permute.xlu0 1
      %932 = vperm.xlu0 %931, %v338
      %v933 = vpop.permute.xlu0 %932
      %935 = vset.pattern.permute.xlu0 1
      %936 = vperm.xlu0 %935, %v339
      %v937 = vpop.permute.xlu0 %936
      %939 = vset.pattern.permute.xlu0 1
      %940 = vperm.xlu0 %939, %v340
      %v941 = vpop.permute.xlu0 %940
      %943 = vset.pattern.permute.xlu0 1
      %944 = vperm.xlu0 %943, %v341
      %v945 = vpop.permute.xlu0 %944
      %947 = vset.pattern.permute.xlu0 1
      %948 = vperm.xlu0 %947, %v342
      %v949 = vpop.permute.xlu0 %948
      %951 = vset.pattern.permute.xlu0 1
      %952 = vperm.xlu0 %951, %v343
      %v953 = vpop.permute.xlu0 %952
      %955 = vset.pattern.permute.xlu0 1
      %956 = vperm.xlu0 %955, %v344
      %v957 = vpop.permute.xlu0 %956
      %959 = vset.pattern.permute.xlu0 1
      %960 = vperm.xlu0 %959, %v345
      %v961 = vpop.permute.xlu0 %960
      %963 = vset.pattern.permute.xlu0 1
      %964 = vperm.xlu0 %963, %v346
      %v965 = vpop.permute.xlu0 %964
      %967 = vset.pattern.permute.xlu0 1
      %968 = vperm.xlu0 %967, %v347
      %v969 = vpop.permute.xlu0 %968
      %971 = vset.pattern.permute.xlu0 1
      %972 = vperm.xlu0 %971, %v348
      %v973 = vpop.permute.xlu0 %972
      %975 = vset.pattern.permute.xlu0 1
      %976 = vperm.xlu0 %975, %v349
      %v977 = vpop.permute.xlu0 %976
      %979 = vset.pattern.permute.xlu0 1
      %980 = vperm.xlu0 %979, %v350
      %v981 = vpop.permute.xlu0 %980
      %983 = vset.pattern.permute.xlu0 1
      %984 = vperm.xlu0 %983, %v351
      %v985 = vpop.permute.xlu0 %984
      %987 = vset.pattern.permute.xlu0 1
      %988 = vperm.xlu0 %987, %v352
      %v989 = vpop.permute.xlu0 %988
      %v991 = vlaneseq
      %v992 = vshrl.u32 %v991, 7
      %v993 = vsub.s32 1, %v992
      %v994 = vrot.slane %v770, %v993
      %v995 = vlaneseq
      %v996 = vshrl.u32 %v995, 7
      %v997 = vsub.s32 3, %v996
      %v998 = vrot.slane %v770, %v997
      %v999 = vlaneseq
      %v1000 = vshrl.u32 %v999, 7
      %v1001 = vsub.s32 5, %v1000
      %v1002 = vrot.slane %v770, %v1001
      %v1006 = vlaneseq
      %v1007 = vshrl.u32 %v1006, 7
      %v1008 = vsub.s32 1, %v1007
      %v1009 = vrot.slane %v994, %v1008
      %v1010 = vlaneseq
      %v1011 = vshrl.u32 %v1010, 7
      %v1012 = vsub.s32 1, %v1011
      %v1013 = vrot.slane %v998, %v1012
      %v1014 = vlaneseq
      %v1015 = vshrl.u32 %v1014, 7
      %v1016 = vsub.s32 1, %v1015
      %v1017 = vrot.slane %v1002, %v1016
      %v1018 = vmul.f32 %v929, %v1009
      %v1019 = vmul.f32 %v929, %v1013
      %v1020 = vmul.f32 %v929, %v1017
      %v1021 = vmul.f32 %v933, %v1009
      %v1022 = vmul.f32 %v933, %v1013
      %v1023 = vmul.f32 %v933, %v1017
      %v1024 = vmul.f32 %v937, %v1009
      %v1025 = vmul.f32 %v937, %v1013
      %v1026 = vmul.f32 %v937, %v1017
      %v1027 = vmul.f32 %v941, %v1009
      %v1028 = vmul.f32 %v941, %v1013
      %v1029 = vmul.f32 %v941, %v1017
      %v1030 = vmul.f32 %v945, %v1009
      %v1031 = vmul.f32 %v945, %v1013
      %v1032 = vmul.f32 %v945, %v1017
      %v1033 = vmul.f32 %v949, %v1009
      %v1034 = vmul.f32 %v949, %v1013
      %v1035 = vmul.f32 %v949, %v1017
      %v1036 = vmul.f32 %v953, %v1009
      %v1037 = vmul.f32 %v953, %v1013
      %v1038 = vmul.f32 %v953, %v1017
      %v1039 = vmul.f32 %v957, %v1009
      %v1040 = vmul.f32 %v957, %v1013
      %v1041 = vmul.f32 %v957, %v1017
      %v1042 = vmul.f32 %v961, %v1009
      %v1043 = vmul.f32 %v961, %v1013
      %v1044 = vmul.f32 %v961, %v1017
      %v1045 = vmul.f32 %v965, %v1009
      %v1046 = vmul.f32 %v965, %v1013
      %v1047 = vmul.f32 %v965, %v1017
      %v1048 = vmul.f32 %v969, %v1009
      %v1049 = vmul.f32 %v969, %v1013
      %v1050 = vmul.f32 %v969, %v1017
      %v1051 = vmul.f32 %v973, %v1009
      %v1052 = vmul.f32 %v973, %v1013
      %v1053 = vmul.f32 %v973, %v1017
      %v1054 = vmul.f32 %v977, %v1009
      %v1055 = vmul.f32 %v977, %v1013
      %v1056 = vmul.f32 %v977, %v1017
      %v1057 = vmul.f32 %v981, %v1009
      %v1058 = vmul.f32 %v981, %v1013
      %v1059 = vmul.f32 %v981, %v1017
      %v1060 = vmul.f32 %v985, %v1009
      %v1061 = vmul.f32 %v985, %v1013
      %v1062 = vmul.f32 %v985, %v1017
      %v1063 = vmul.f32 %v989, %v1009
      %v1064 = vmul.f32 %v989, %v1013
      %v1065 = vmul.f32 %v989, %v1017
      %v1066 = vadd.f32 %v879, %v1018
      %v1067 = vadd.f32 %v880, %v1019
      %v1068 = vadd.f32 %v881, %v1020
      %v1069 = vadd.f32 %v882, %v1021
      %v1070 = vadd.f32 %v883, %v1022
      %v1071 = vadd.f32 %v884, %v1023
      %v1072 = vadd.f32 %v885, %v1024
      %v1073 = vadd.f32 %v886, %v1025
      %v1074 = vadd.f32 %v887, %v1026
      %v1075 = vadd.f32 %v888, %v1027
      %v1076 = vadd.f32 %v889, %v1028
      %v1077 = vadd.f32 %v890, %v1029
      %v1078 = vadd.f32 %v891, %v1030
      %v1079 = vadd.f32 %v892, %v1031
      %v1080 = vadd.f32 %v893, %v1032
      %v1081 = vadd.f32 %v894, %v1033
      %v1082 = vadd.f32 %v895, %v1034
      %v1083 = vadd.f32 %v896, %v1035
      %v1084 = vadd.f32 %v897, %v1036
      %v1085 = vadd.f32 %v898, %v1037
      %v1086 = vadd.f32 %v899, %v1038
      %v1087 = vadd.f32 %v900, %v1039
      %v1088 = vadd.f32 %v901, %v1040
      %v1089 = vadd.f32 %v902, %v1041
      %v1090 = vadd.f32 %v903, %v1042
      %v1091 = vadd.f32 %v904, %v1043
      %v1092 = vadd.f32 %v905, %v1044
      %v1093 = vadd.f32 %v906, %v1045
      %v1094 = vadd.f32 %v907, %v1046
      %v1095 = vadd.f32 %v908, %v1047
      %v1096 = vadd.f32 %v909, %v1048
      %v1097 = vadd.f32 %v910, %v1049
      %v1098 = vadd.f32 %v911, %v1050
      %v1099 = vadd.f32 %v912, %v1051
      %v1100 = vadd.f32 %v913, %v1052
      %v1101 = vadd.f32 %v914, %v1053
      %v1102 = vadd.f32 %v915, %v1054
      %v1103 = vadd.f32 %v916, %v1055
      %v1104 = vadd.f32 %v917, %v1056
      %v1105 = vadd.f32 %v918, %v1057
      %v1106 = vadd.f32 %v919, %v1058
      %v1107 = vadd.f32 %v920, %v1059
      %v1108 = vadd.f32 %v921, %v1060
      %v1109 = vadd.f32 %v922, %v1061
      %v1110 = vadd.f32 %v923, %v1062
      %v1111 = vadd.f32 %v924, %v1063
      %v1112 = vadd.f32 %v925, %v1064
      %v1113 = vadd.f32 %v926, %v1065
      %v1114 = vadd.f32 %v1066, %v372
      %v1115 = vadd.f32 %v1067, %v372
      %v1116 = vadd.f32 %v1068, %v372
      %v1117 = vadd.f32 %v1069, %v377
      %v1118 = vadd.f32 %v1070, %v377
      %v1119 = vadd.f32 %v1071, %v377
      %v1120 = vadd.f32 %v1072, %v382
      %v1121 = vadd.f32 %v1073, %v382
      %v1122 = vadd.f32 %v1074, %v382
      %v1123 = vadd.f32 %v1075, %v387
      %v1124 = vadd.f32 %v1076, %v387
      %v1125 = vadd.f32 %v1077, %v387
      %v1126 = vadd.f32 %v1078, %v392
      %v1127 = vadd.f32 %v1079, %v392
      %v1128 = vadd.f32 %v1080, %v392
      %v1129 = vadd.f32 %v1081, %v397
      %v1130 = vadd.f32 %v1082, %v397
      %v1131 = vadd.f32 %v1083, %v397
      %v1132 = vadd.f32 %v1084, %v402
      %v1133 = vadd.f32 %v1085, %v402
      %v1134 = vadd.f32 %v1086, %v402
      %v1135 = vadd.f32 %v1087, %v407
      %v1136 = vadd.f32 %v1088, %v407
      %v1137 = vadd.f32 %v1089, %v407
      %v1138 = vadd.f32 %v1090, %v412
      %v1139 = vadd.f32 %v1091, %v412
      %v1140 = vadd.f32 %v1092, %v412
      %v1141 = vadd.f32 %v1093, %v417
      %v1142 = vadd.f32 %v1094, %v417
      %v1143 = vadd.f32 %v1095, %v417
      %v1144 = vadd.f32 %v1096, %v422
      %v1145 = vadd.f32 %v1097, %v422
      %v1146 = vadd.f32 %v1098, %v422
      %v1147 = vadd.f32 %v1099, %v427
      %v1148 = vadd.f32 %v1100, %v427
      %v1149 = vadd.f32 %v1101, %v427
      %v1150 = vadd.f32 %v1102, %v432
      %v1151 = vadd.f32 %v1103, %v432
      %v1152 = vadd.f32 %v1104, %v432
      %v1153 = vadd.f32 %v1105, %v437
      %v1154 = vadd.f32 %v1106, %v437
      %v1155 = vadd.f32 %v1107, %v437
      %v1156 = vadd.f32 %v1108, %v442
      %v1157 = vadd.f32 %v1109, %v442
      %v1158 = vadd.f32 %v1110, %v442
      %v1159 = vadd.f32 %v1111, %v447
      %v1160 = vadd.f32 %v1112, %v447
      %v1161 = vadd.f32 %v1113, %v447
      %v1162 = vtanh.pop %v1114
      %v1163 = vtanh.pop %v1115
      %v1164 = vtanh.pop %v1116
      %v1165 = vtanh.pop %v1117
      %v1166 = vtanh.pop %v1118
      %v1167 = vtanh.pop %v1119
      %v1168 = vtanh.pop %v1120
      %v1169 = vtanh.pop %v1121
      %v1170 = vtanh.pop %v1122
      %v1171 = vtanh.pop %v1123
      %v1172 = vtanh.pop %v1124
      %v1173 = vtanh.pop %v1125
      %v1174 = vtanh.pop %v1126
      %v1175 = vtanh.pop %v1127
      %v1176 = vtanh.pop %v1128
      %v1177 = vtanh.pop %v1129
      %v1178 = vtanh.pop %v1130
      %v1179 = vtanh.pop %v1131
      %v1180 = vtanh.pop %v1132
      %v1181 = vtanh.pop %v1133
      %v1182 = vtanh.pop %v1134
      %v1183 = vtanh.pop %v1135
      %v1184 = vtanh.pop %v1136
      %v1185 = vtanh.pop %v1137
      %v1186 = vtanh.pop %v1138
      %v1187 = vtanh.pop %v1139
      %v1188 = vtanh.pop %v1140
      %v1189 = vtanh.pop %v1141
      %v1190 = vtanh.pop %v1142
      %v1191 = vtanh.pop %v1143
      %v1192 = vtanh.pop %v1144
      %v1193 = vtanh.pop %v1145
      %v1194 = vtanh.pop %v1146
      %v1195 = vtanh.pop %v1147
      %v1196 = vtanh.pop %v1148
      %v1197 = vtanh.pop %v1149
      %v1198 = vtanh.pop %v1150
      %v1199 = vtanh.pop %v1151
      %v1200 = vtanh.pop %v1152
      %v1201 = vtanh.pop %v1153
      %v1202 = vtanh.pop %v1154
      %v1203 = vtanh.pop %v1155
      %v1204 = vtanh.pop %v1156
      %v1205 = vtanh.pop %v1157
      %v1206 = vtanh.pop %v1158
      %v1207 = vtanh.pop %v1159
      %v1208 = vtanh.pop %v1160
      %v1209 = vtanh.pop %v1161
      %v1210 = vpack.c.bf16 %v1165, %v1162
      %v1211 = vpack.c.bf16 %v1166, %v1163
      %v1212 = vpack.c.bf16 %v1167, %v1164
      %v1213 = vpack.c.bf16 %v1171, %v1168
      %v1214 = vpack.c.bf16 %v1172, %v1169
      %v1215 = vpack.c.bf16 %v1173, %v1170
      %v1216 = vpack.c.bf16 %v1177, %v1174
      %v1217 = vpack.c.bf16 %v1178, %v1175
      %v1218 = vpack.c.bf16 %v1179, %v1176
      %v1219 = vpack.c.bf16 %v1183, %v1180
      %v1220 = vpack.c.bf16 %v1184, %v1181
      %v1221 = vpack.c.bf16 %v1185, %v1182
      %v1222 = vpack.c.bf16 %v1189, %v1186
      %v1223 = vpack.c.bf16 %v1190, %v1187
      %v1224 = vpack.c.bf16 %v1191, %v1188
      %v1225 = vpack.c.bf16 %v1195, %v1192
      %v1226 = vpack.c.bf16 %v1196, %v1193
      %v1227 = vpack.c.bf16 %v1197, %v1194
      %v1228 = vpack.c.bf16 %v1201, %v1198
      %v1229 = vpack.c.bf16 %v1202, %v1199
      %v1230 = vpack.c.bf16 %v1203, %v1200
      %v1231 = vpack.c.bf16 %v1207, %v1204
      %v1232 = vpack.c.bf16 %v1208, %v1205
      %v1233 = vpack.c.bf16 %v1209, %v1206
      %v1250 = vunpack.c.l.b16 %v449
      %v1251 = vunpack.c.l.b16 %v450
      %v1252 = vunpack.c.l.b16 %v451
      %v1253 = vunpack.c.l.b16 %v452
      %v1254 = vunpack.c.l.b16 %v453
      %v1255 = vunpack.c.l.b16 %v454
      %v1256 = vunpack.c.l.b16 %v455
      %v1257 = vunpack.c.l.b16 %v456
      %v1258 = vunpack.c.l.b16 %v457
      %v1259 = vunpack.c.l.b16 %v458
      %v1260 = vunpack.c.l.b16 %v459
      %v1261 = vunpack.c.l.b16 %v460
      %v1262 = vunpack.c.l.b16 %v461
      %v1263 = vunpack.c.l.b16 %v462
      %v1264 = vunpack.c.l.b16 %v463
      %v1265 = vunpack.c.l.b16 %v464
      %v1266 = vpack.c.b16 %v1251, %v1250
      %v1267 = vpack.c.b16 %v1253, %v1252
      %v1268 = vpack.c.b16 %v1255, %v1254
      %v1269 = vpack.c.b16 %v1257, %v1256
      %v1270 = vpack.c.b16 %v1259, %v1258
      %v1271 = vpack.c.b16 %v1261, %v1260
      %v1272 = vpack.c.b16 %v1263, %v1262
      %v1273 = vpack.c.b16 %v1265, %v1264
      %1282 = vmatprep.subr.bf16.mxu0 %v1211
      %1283 = vmatpush1.bf16.msra.mxu0 %v1210
      %1284 = vmatprep.subr.bf16.mxu0 %v1214
      %1285 = vmatpush1.bf16.msra.mxu0 %v1213
      %1286 = vmatprep.subr.bf16.mxu0 %v1217
      %1287 = vmatpush1.bf16.msra.mxu0 %v1216
      %1288 = vmatprep.subr.bf16.mxu0 %v1220
      %1289 = vmatpush1.bf16.msra.mxu0 %v1219
      %1290 = vmatprep.subr.bf16.mxu0 %v1223
      %1291 = vmatpush1.bf16.msra.mxu0 %v1222
      %1292 = vmatprep.subr.bf16.mxu0 %v1226
      %1293 = vmatpush1.bf16.msra.mxu0 %v1225
      %1294 = vmatprep.subr.bf16.mxu0 %v1229
      %1295 = vmatpush1.bf16.msra.mxu0 %v1228
      %1296 = vmatprep.subr.bf16.mxu0 %v1232
      %1297 = vmatpush1.bf16.msra.mxu0 %v1231
      %1298 = vmatprep.subr.bf16.mxu0 0
      %1299 = vmatpush1.bf16.msra.mxu0 0
      %1300 = vmatprep.subr.bf16.mxu0 0
      %1301 = vmatpush1.bf16.msra.mxu0 0
      %1302 = vmatprep.subr.bf16.mxu0 0
      %1303 = vmatpush1.bf16.msra.mxu0 0
      %1304 = vmatprep.subr.bf16.mxu0 0
      %1305 = vmatpush1.bf16.msra.mxu0 0
      %1306 = vmatprep.subr.bf16.mxu0 0
      %1307 = vmatpush1.bf16.msra.mxu0 0
      %1308 = vmatprep.subr.bf16.mxu0 0
      %1309 = vmatpush1.bf16.msra.mxu0 0
      %1310 = vmatprep.subr.bf16.mxu0 0
      %1311 = vmatpush1.bf16.msra.mxu0 0
      %1312 = vmatprep.subr.bf16.mxu0 0
      %1313 = vmatpush1.bf16.msra.mxu0 0
      %1314 = vmatprep.mubr.bf16.mxu0 0
      %1315 = vmatmul.mubr.bf16.gmra.mrb[0].mxu0 %v1266
      %v1316 = vpop.f32.mrb[0].mxu0
      %v1317 = vadd.f32 %v484, %v1316
      %v1318 = vpop.f32.mrb[0].mxu0
      %v1319 = vadd.f32 %v484, %v1318
      %v1320 = vpop.f32.mrb[0].mxu0
      %v1321 = vadd.f32 %v489, %v1320
      %v1322 = vpop.f32.mrb[0].mxu0
      %v1323 = vadd.f32 %v489, %v1322
      %1324 = vmatprep.mubr.bf16.mxu0 0
      %1325 = vmatmul.mubr.bf16.gmra.mrb[0].mxu0 %v1267
      %v1326 = vpop.f32.mrb[0].mxu0
      %v1327 = vadd.f32 %v494, %v1326
      %v1328 = vpop.f32.mrb[0].mxu0
      %v1329 = vadd.f32 %v494, %v1328
      %v1330 = vpop.f32.mrb[0].mxu0
      %v1331 = vadd.f32 %v499, %v1330
      %v1332 = vpop.f32.mrb[0].mxu0
      %v1333 = vadd.f32 %v499, %v1332
      %1334 = vmatprep.mubr.bf16.mxu0 0
      %1335 = vmatmul.mubr.bf16.gmra.mrb[0].mxu0 %v1268
      %v1336 = vpop.f32.mrb[0].mxu0
      %v1337 = vadd.f32 %v504, %v1336
      %v1338 = vpop.f32.mrb[0].mxu0
      %v1339 = vadd.f32 %v504, %v1338
      %v1340 = vpop.f32.mrb[0].mxu0
      %v1341 = vadd.f32 %v509, %v1340
      %v1342 = vpop.f32.mrb[0].mxu0
      %v1343 = vadd.f32 %v509, %v1342
      %1344 = vmatprep.mubr.bf16.mxu0 0
      %1345 = vmatmul.mubr.bf16.gmra.mrb[0].mxu0 %v1269
      %v1346 = vpop.f32.mrb[0].mxu0
      %v1347 = vadd.f32 %v514, %v1346
      %v1348 = vpop.f32.mrb[0].mxu0
      %v1349 = vadd.f32 %v514, %v1348
      %v1350 = vpop.f32.mrb[0].mxu0
      %v1351 = vadd.f32 %v519, %v1350
      %v1352 = vpop.f32.mrb[0].mxu0
      %v1353 = vadd.f32 %v519, %v1352
      %1354 = vmatprep.mubr.bf16.mxu0 0
      %1355 = vmatmul.mubr.bf16.gmra.mrb[0].mxu0 %v1270
      %v1356 = vpop.f32.mrb[0].mxu0
      %v1357 = vadd.f32 %v524, %v1356
      %v1358 = vpop.f32.mrb[0].mxu0
      %v1359 = vadd.f32 %v524, %v1358
      %v1360 = vpop.f32.mrb[0].mxu0
      %v1361 = vadd.f32 %v529, %v1360
      %v1362 = vpop.f32.mrb[0].mxu0
      %v1363 = vadd.f32 %v529, %v1362
      %1364 = vmatprep.mubr.bf16.mxu0 0
      %1365 = vmatmul.mubr.bf16.gmra.mrb[0].mxu0 %v1271
      %v1366 = vpop.f32.mrb[0].mxu0
      %v1367 = vadd.f32 %v534, %v1366
      %v1368 = vpop.f32.mrb[0].mxu0
      %v1369 = vadd.f32 %v534, %v1368
      %v1370 = vpop.f32.mrb[0].mxu0
      %v1371 = vadd.f32 %v539, %v1370
      %v1372 = vpop.f32.mrb[0].mxu0
      %v1373 = vadd.f32 %v539, %v1372
      %1374 = vmatprep.mubr.bf16.mxu0 0
      %1375 = vmatmul.mubr.bf16.gmra.mrb[0].mxu0 %v1272
      %v1376 = vpop.f32.mrb[0].mxu0
      %v1377 = vadd.f32 %v544, %v1376
      %v1378 = vpop.f32.mrb[0].mxu0
      %v1379 = vadd.f32 %v544, %v1378
      %v1380 = vpop.f32.mrb[0].mxu0
      %v1381 = vadd.f32 %v549, %v1380
      %v1382 = vpop.f32.mrb[0].mxu0
      %v1383 = vadd.f32 %v549, %v1382
      %1384 = vmatprep.mubr.bf16.mxu0 0
      %1385 = vmatmul.mubr.bf16.gmra.mrb[0].mxu0 %v1273
      %v1386 = vpop.f32.mrb[0].mxu0
      %v1387 = vadd.f32 %v554, %v1386
      %v1388 = vpop.f32.mrb[0].mxu0
      %v1389 = vadd.f32 %v554, %v1388
      %v1390 = vpop.f32.mrb[0].mxu0
      %v1391 = vadd.f32 %v559, %v1390
      %v1392 = vpop.f32.mrb[0].mxu0
      %v1393 = vadd.f32 %v559, %v1392
      %1394 = vdwg.mxu0
      %1395 = vmatprep.subr.bf16.mxu0 0
      %1396 = vmatpush1.bf16.msra.mxu0 %v1212
      %1397 = vmatprep.subr.bf16.mxu0 0
      %1398 = vmatpush1.bf16.msra.mxu0 %v1215
      %1399 = vmatprep.subr.bf16.mxu0 0
      %1400 = vmatpush1.bf16.msra.mxu0 %v1218
      %1401 = vmatprep.subr.bf16.mxu0 0
      %1402 = vmatpush1.bf16.msra.mxu0 %v1221
      %1403 = vmatprep.subr.bf16.mxu0 0
      %1404 = vmatpush1.bf16.msra.mxu0 %v1224
      %1405 = vmatprep.subr.bf16.mxu0 0
      %1406 = vmatpush1.bf16.msra.mxu0 %v1227
      %1407 = vmatprep.subr.bf16.mxu0 0
      %1408 = vmatpush1.bf16.msra.mxu0 %v1230
      %1409 = vmatprep.subr.bf16.mxu0 0
      %1410 = vmatpush1.bf16.msra.mxu0 %v1233
      %1411 = vmatprep.subr.bf16.mxu0 0
      %1412 = vmatpush1.bf16.msra.mxu0 0
      %1413 = vmatprep.subr.bf16.mxu0 0
      %1414 = vmatpush1.bf16.msra.mxu0 0
      %1415 = vmatprep.subr.bf16.mxu0 0
      %1416 = vmatpush1.bf16.msra.mxu0 0
      %1417 = vmatprep.subr.bf16.mxu0 0
      %1418 = vmatpush1.bf16.msra.mxu0 0
      %1419 = vmatprep.subr.bf16.mxu0 0
      %1420 = vmatpush1.bf16.msra.mxu0 0
      %1421 = vmatprep.subr.bf16.mxu0 0
      %1422 = vmatpush1.bf16.msra.mxu0 0
      %1423 = vmatprep.subr.bf16.mxu0 0
      %1424 = vmatpush1.bf16.msra.mxu0 0
      %1425 = vmatprep.subr.bf16.mxu0 0
      %1426 = vmatpush1.bf16.msra.mxu0 0
      %1427 = vmatprep.mubr.bf16.mxu0 0
      %1428 = vmatmul.mubr.bf16.gmra.mrb[0].mxu0 %v1266
      %v1429 = vpop.f32.mrb[0].mxu0
      %v1430 = vadd.f32 %v484, %v1429
      %v1431 = vpop.f32.mrb[0].mxu0
      %v1432 = vpop.f32.mrb[0].mxu0
      %v1433 = vadd.f32 %v489, %v1432
      %v1434 = vpop.f32.mrb[0].mxu0
      %1435 = vmatprep.mubr.bf16.mxu0 0
      %1436 = vmatmul.mubr.bf16.gmra.mrb[0].mxu0 %v1267
      %v1437 = vpop.f32.mrb[0].mxu0
      %v1438 = vadd.f32 %v494, %v1437
      %v1439 = vpop.f32.mrb[0].mxu0
      %v1440 = vpop.f32.mrb[0].mxu0
      %v1441 = vadd.f32 %v499, %v1440
      %v1442 = vpop.f32.mrb[0].mxu0
      %1443 = vmatprep.mubr.bf16.mxu0 0
      %1444 = vmatmul.mubr.bf16.gmra.mrb[0].mxu0 %v1268
      %v1445 = vpop.f32.mrb[0].mxu0
      %v1446 = vadd.f32 %v504, %v1445
      %v1447 = vpop.f32.mrb[0].mxu0
      %v1448 = vpop.f32.mrb[0].mxu0
      %v1449 = vadd.f32 %v509, %v1448
      %v1450 = vpop.f32.mrb[0].mxu0
      %1451 = vmatprep.mubr.bf16.mxu0 0
      %1452 = vmatmul.mubr.bf16.gmra.mrb[0].mxu0 %v1269
      %v1453 = vpop.f32.mrb[0].mxu0
      %v1454 = vadd.f32 %v514, %v1453
      %v1455 = vpop.f32.mrb[0].mxu0
      %v1456 = vpop.f32.mrb[0].mxu0
      %v1457 = vadd.f32 %v519, %v1456
      %v1458 = vpop.f32.mrb[0].mxu0
      %1459 = vmatprep.mubr.bf16.mxu0 0
      %1460 = vmatmul.mubr.bf16.gmra.mrb[0].mxu0 %v1270
      %v1461 = vpop.f32.mrb[0].mxu0
      %v1462 = vadd.f32 %v524, %v1461
      %v1463 = vpop.f32.mrb[0].mxu0
      %v1464 = vpop.f32.mrb[0].mxu0
      %v1465 = vadd.f32 %v529, %v1464
      %v1466 = vpop.f32.mrb[0].mxu0
      %1467 = vmatprep.mubr.bf16.mxu0 0
      %1468 = vmatmul.mubr.bf16.gmra.mrb[0].mxu0 %v1271
      %v1469 = vpop.f32.mrb[0].mxu0
      %v1470 = vadd.f32 %v534, %v1469
      %v1471 = vpop.f32.mrb[0].mxu0
      %v1472 = vpop.f32.mrb[0].mxu0
      %v1473 = vadd.f32 %v539, %v1472
      %v1474 = vpop.f32.mrb[0].mxu0
      %1475 = vmatprep.mubr.bf16.mxu0 0
      %1476 = vmatmul.mubr.bf16.gmra.mrb[0].mxu0 %v1272
      %v1477 = vpop.f32.mrb[0].mxu0
      %v1478 = vadd.f32 %v544, %v1477
      %v1479 = vpop.f32.mrb[0].mxu0
      %v1480 = vpop.f32.mrb[0].mxu0
      %v1481 = vadd.f32 %v549, %v1480
      %v1482 = vpop.f32.mrb[0].mxu0
      %1483 = vmatprep.mubr.bf16.mxu0 0
      %1484 = vmatmul.mubr.bf16.gmra.mrb[0].mxu0 %v1273
      %v1485 = vpop.f32.mrb[0].mxu0
      %v1486 = vadd.f32 %v554, %v1485
      %v1487 = vpop.f32.mrb[0].mxu0
      %v1488 = vpop.f32.mrb[0].mxu0
      %v1489 = vadd.f32 %v559, %v1488
      %v1490 = vpop.f32.mrb[0].mxu0
      %1491 = vdwg.mxu0
      %v1492 = vtanh.pop %v1317
      %v1493 = vtanh.pop %v1319
      %v1494 = vtanh.pop %v1430
      %v1495 = vtanh.pop %v1321
      %v1496 = vtanh.pop %v1323
      %v1497 = vtanh.pop %v1433
      %v1498 = vtanh.pop %v1327
      %v1499 = vtanh.pop %v1329
      %v1500 = vtanh.pop %v1438
      %v1501 = vtanh.pop %v1331
      %v1502 = vtanh.pop %v1333
      %v1503 = vtanh.pop %v1441
      %v1504 = vtanh.pop %v1337
      %v1505 = vtanh.pop %v1339
      %v1506 = vtanh.pop %v1446
      %v1507 = vtanh.pop %v1341
      %v1508 = vtanh.pop %v1343
      %v1509 = vtanh.pop %v1449
      %v1510 = vtanh.pop %v1347
      %v1511 = vtanh.pop %v1349
      %v1512 = vtanh.pop %v1454
      %v1513 = vtanh.pop %v1351
      %v1514 = vtanh.pop %v1353
      %v1515 = vtanh.pop %v1457
      %v1516 = vtanh.pop %v1357
      %v1517 = vtanh.pop %v1359
      %v1518 = vtanh.pop %v1462
      %v1519 = vtanh.pop %v1361
      %v1520 = vtanh.pop %v1363
      %v1521 = vtanh.pop %v1465
      %v1522 = vtanh.pop %v1367
      %v1523 = vtanh.pop %v1369
      %v1524 = vtanh.pop %v1470
      %v1525 = vtanh.pop %v1371
      %v1526 = vtanh.pop %v1373
      %v1527 = vtanh.pop %v1473
      %v1528 = vtanh.pop %v1377
      %v1529 = vtanh.pop %v1379
      %v1530 = vtanh.pop %v1478
      %v1531 = vtanh.pop %v1381
      %v1532 = vtanh.pop %v1383
      %v1533 = vtanh.pop %v1481
      %v1534 = vtanh.pop %v1387
      %v1535 = vtanh.pop %v1389
      %v1536 = vtanh.pop %v1486
      %v1537 = vtanh.pop %v1391
      %v1538 = vtanh.pop %v1393
      %v1539 = vtanh.pop %v1489
      %v1540 = vpack.c.bf16 %v1495, %v1492
      %v1541 = vpack.c.bf16 %v1496, %v1493
      %v1542 = vpack.c.bf16 %v1497, %v1494
      %v1543 = vpack.c.bf16 %v1501, %v1498
      %v1544 = vpack.c.bf16 %v1502, %v1499
      %v1545 = vpack.c.bf16 %v1503, %v1500
      %v1546 = vpack.c.bf16 %v1507, %v1504
      %v1547 = vpack.c.bf16 %v1508, %v1505
      %v1548 = vpack.c.bf16 %v1509, %v1506
      %v1549 = vpack.c.bf16 %v1513, %v1510
      %v1550 = vpack.c.bf16 %v1514, %v1511
      %v1551 = vpack.c.bf16 %v1515, %v1512
      %v1552 = vpack.c.bf16 %v1519, %v1516
      %v1553 = vpack.c.bf16 %v1520, %v1517
      %v1554 = vpack.c.bf16 %v1521, %v1518
      %v1555 = vpack.c.bf16 %v1525, %v1522
      %v1556 = vpack.c.bf16 %v1526, %v1523
      %v1557 = vpack.c.bf16 %v1527, %v1524
      %v1558 = vpack.c.bf16 %v1531, %v1528
      %v1559 = vpack.c.bf16 %v1532, %v1529
      %v1560 = vpack.c.bf16 %v1533, %v1530
      %v1561 = vpack.c.bf16 %v1537, %v1534
      %v1562 = vpack.c.bf16 %v1538, %v1535
      %v1563 = vpack.c.bf16 %v1539, %v1536
      %v1580 = vunpack.c.l.b16 %v561
      %v1581 = vunpack.c.l.b16 %v562
      %v1582 = vunpack.c.l.b16 %v563
      %v1583 = vunpack.c.l.b16 %v564
      %v1584 = vunpack.c.l.b16 %v565
      %v1585 = vunpack.c.l.b16 %v566
      %v1586 = vunpack.c.l.b16 %v567
      %v1587 = vunpack.c.l.b16 %v568
      %v1588 = vunpack.c.l.b16 %v569
      %v1589 = vunpack.c.l.b16 %v570
      %v1590 = vunpack.c.l.b16 %v571
      %v1591 = vunpack.c.l.b16 %v572
      %v1592 = vunpack.c.l.b16 %v573
      %v1593 = vunpack.c.l.b16 %v574
      %v1594 = vunpack.c.l.b16 %v575
      %v1595 = vunpack.c.l.b16 %v576
      %v1596 = vpack.c.b16 %v1581, %v1580
      %v1597 = vpack.c.b16 %v1583, %v1582
      %v1598 = vpack.c.b16 %v1585, %v1584
      %v1599 = vpack.c.b16 %v1587, %v1586
      %v1600 = vpack.c.b16 %v1589, %v1588
      %v1601 = vpack.c.b16 %v1591, %v1590
      %v1602 = vpack.c.b16 %v1593, %v1592
      %v1603 = vpack.c.b16 %v1595, %v1594
      %1612 = vmatprep.subr.bf16.mxu0 %v1541
      %1613 = vmatpush1.bf16.msra.mxu0 %v1540
      %1614 = vmatprep.subr.bf16.mxu0 %v1544
      %1615 = vmatpush1.bf16.msra.mxu0 %v1543
      %1616 = vmatprep.subr.bf16.mxu0 %v1547
      %1617 = vmatpush1.bf16.msra.mxu0 %v1546
      %1618 = vmatprep.subr.bf16.mxu0 %v1550
      %1619 = vmatpush1.bf16.msra.mxu0 %v1549
      %1620 = vmatprep.subr.bf16.mxu0 %v1553
      %1621 = vmatpush1.bf16.msra.mxu0 %v1552
      %1622 = vmatprep.subr.bf16.mxu0 %v1556
      %1623 = vmatpush1.bf16.msra.mxu0 %v1555
      %1624 = vmatprep.subr.bf16.mxu0 %v1559
      %1625 = vmatpush1.bf16.msra.mxu0 %v1558
      %1626 = vmatprep.subr.bf16.mxu0 %v1562
      %1627 = vmatpush1.bf16.msra.mxu0 %v1561
      %1628 = vmatprep.subr.bf16.mxu0 0
      %1629 = vmatpush1.bf16.msra.mxu0 0
      %1630 = vmatprep.subr.bf16.mxu0 0
      %1631 = vmatpush1.bf16.msra.mxu0 0
      %1632 = vmatprep.subr.bf16.mxu0 0
      %1633 = vmatpush1.bf16.msra.mxu0 0
      %1634 = vmatprep.subr.bf16.mxu0 0
      %1635 = vmatpush1.bf16.msra.mxu0 0
      %1636 = vmatprep.subr.bf16.mxu0 0
      %1637 = vmatpush1.bf16.msra.mxu0 0
      %1638 = vmatprep.subr.bf16.mxu0 0
      %1639 = vmatpush1.bf16.msra.mxu0 0
      %1640 = vmatprep.subr.bf16.mxu0 0
      %1641 = vmatpush1.bf16.msra.mxu0 0
      %1642 = vmatprep.subr.bf16.mxu0 0
      %1643 = vmatpush1.bf16.msra.mxu0 0
      %1644 = vmatprep.mubr.bf16.mxu0 0
      %1645 = vmatmul.mubr.bf16.gmra.mrb[0].mxu0 %v1596
      %v1646 = vpop.f32.mrb[0].mxu0
      %v1647 = vadd.f32 %v596, %v1646
      %v1648 = vpop.f32.mrb[0].mxu0
      %v1649 = vadd.f32 %v596, %v1648
      %v1650 = vpop.f32.mrb[0].mxu0
      %v1651 = vadd.f32 %v601, %v1650
      %v1652 = vpop.f32.mrb[0].mxu0
      %v1653 = vadd.f32 %v601, %v1652
      %1654 = vmatprep.mubr.bf16.mxu0 0
      %1655 = vmatmul.mubr.bf16.gmra.mrb[0].mxu0 %v1597
      %v1656 = vpop.f32.mrb[0].mxu0
      %v1657 = vadd.f32 %v606, %v1656
      %v1658 = vpop.f32.mrb[0].mxu0
      %v1659 = vadd.f32 %v606, %v1658
      %v1660 = vpop.f32.mrb[0].mxu0
      %v1661 = vadd.f32 %v611, %v1660
      %v1662 = vpop.f32.mrb[0].mxu0
      %v1663 = vadd.f32 %v611, %v1662
      %1664 = vmatprep.mubr.bf16.mxu0 0
      %1665 = vmatmul.mubr.bf16.gmra.mrb[0].mxu0 %v1598
      %v1666 = vpop.f32.mrb[0].mxu0
      %v1667 = vadd.f32 %v616, %v1666
      %v1668 = vpop.f32.mrb[0].mxu0
      %v1669 = vadd.f32 %v616, %v1668
      %v1670 = vpop.f32.mrb[0].mxu0
      %v1671 = vadd.f32 %v621, %v1670
      %v1672 = vpop.f32.mrb[0].mxu0
      %v1673 = vadd.f32 %v621, %v1672
      %1674 = vmatprep.mubr.bf16.mxu0 0
      %1675 = vmatmul.mubr.bf16.gmra.mrb[0].mxu0 %v1599
      %v1676 = vpop.f32.mrb[0].mxu0
      %v1677 = vadd.f32 %v626, %v1676
      %v1678 = vpop.f32.mrb[0].mxu0
      %v1679 = vadd.f32 %v626, %v1678
      %v1680 = vpop.f32.mrb[0].mxu0
      %v1681 = vadd.f32 %v631, %v1680
      %v1682 = vpop.f32.mrb[0].mxu0
      %v1683 = vadd.f32 %v631, %v1682
      %1684 = vmatprep.mubr.bf16.mxu0 0
      %1685 = vmatmul.mubr.bf16.gmra.mrb[0].mxu0 %v1600
      %v1686 = vpop.f32.mrb[0].mxu0
      %v1687 = vadd.f32 %v636, %v1686
      %v1688 = vpop.f32.mrb[0].mxu0
      %v1689 = vadd.f32 %v636, %v1688
      %v1690 = vpop.f32.mrb[0].mxu0
      %v1691 = vadd.f32 %v641, %v1690
      %v1692 = vpop.f32.mrb[0].mxu0
      %v1693 = vadd.f32 %v641, %v1692
      %1694 = vmatprep.mubr.bf16.mxu0 0
      %1695 = vmatmul.mubr.bf16.gmra.mrb[0].mxu0 %v1601
      %v1696 = vpop.f32.mrb[0].mxu0
      %v1697 = vadd.f32 %v646, %v1696
      %v1698 = vpop.f32.mrb[0].mxu0
      %v1699 = vadd.f32 %v646, %v1698
      %v1700 = vpop.f32.mrb[0].mxu0
      %v1701 = vadd.f32 %v651, %v1700
      %v1702 = vpop.f32.mrb[0].mxu0
      %v1703 = vadd.f32 %v651, %v1702
      %1704 = vmatprep.mubr.bf16.mxu0 0
      %1705 = vmatmul.mubr.bf16.gmra.mrb[0].mxu0 %v1602
      %v1706 = vpop.f32.mrb[0].mxu0
      %v1707 = vadd.f32 %v656, %v1706
      %v1708 = vpop.f32.mrb[0].mxu0
      %v1709 = vadd.f32 %v656, %v1708
      %v1710 = vpop.f32.mrb[0].mxu0
      %v1711 = vadd.f32 %v661, %v1710
      %v1712 = vpop.f32.mrb[0].mxu0
      %v1713 = vadd.f32 %v661, %v1712
      %1714 = vmatprep.mubr.bf16.mxu0 0
      %1715 = vmatmul.mubr.bf16.gmra.mrb[0].mxu0 %v1603
      %v1716 = vpop.f32.mrb[0].mxu0
      %v1717 = vadd.f32 %v666, %v1716
      %v1718 = vpop.f32.mrb[0].mxu0
      %v1719 = vadd.f32 %v666, %v1718
      %v1720 = vpop.f32.mrb[0].mxu0
      %v1721 = vadd.f32 %v671, %v1720
      %v1722 = vpop.f32.mrb[0].mxu0
      %v1723 = vadd.f32 %v671, %v1722
      %1724 = vdwg.mxu0
      %1725 = vmatprep.subr.bf16.mxu0 0
      %1726 = vmatpush1.bf16.msra.mxu0 %v1542
      %1727 = vmatprep.subr.bf16.mxu0 0
      %1728 = vmatpush1.bf16.msra.mxu0 %v1545
      %1729 = vmatprep.subr.bf16.mxu0 0
      %1730 = vmatpush1.bf16.msra.mxu0 %v1548
      %1731 = vmatprep.subr.bf16.mxu0 0
      %1732 = vmatpush1.bf16.msra.mxu0 %v1551
      %1733 = vmatprep.subr.bf16.mxu0 0
      %1734 = vmatpush1.bf16.msra.mxu0 %v1554
      %1735 = vmatprep.subr.bf16.mxu0 0
      %1736 = vmatpush1.bf16.msra.mxu0 %v1557
      %1737 = vmatprep.subr.bf16.mxu0 0
      %1738 = vmatpush1.bf16.msra.mxu0 %v1560
      %1739 = vmatprep.subr.bf16.mxu0 0
      %1740 = vmatpush1.bf16.msra.mxu0 %v1563
      %1741 = vmatprep.subr.bf16.mxu0 0
      %1742 = vmatpush1.bf16.msra.mxu0 0
      %1743 = vmatprep.subr.bf16.mxu0 0
      %1744 = vmatpush1.bf16.msra.mxu0 0
      %1745 = vmatprep.subr.bf16.mxu0 0
      %1746 = vmatpush1.bf16.msra.mxu0 0
      %1747 = vmatprep.subr.bf16.mxu0 0
      %1748 = vmatpush1.bf16.msra.mxu0 0
      %1749 = vmatprep.subr.bf16.mxu0 0
      %1750 = vmatpush1.bf16.msra.mxu0 0
      %1751 = vmatprep.subr.bf16.mxu0 0
      %1752 = vmatpush1.bf16.msra.mxu0 0
      %1753 = vmatprep.subr.bf16.mxu0 0
      %1754 = vmatpush1.bf16.msra.mxu0 0
      %1755 = vmatprep.subr.bf16.mxu0 0
      %1756 = vmatpush1.bf16.msra.mxu0 0
      %1757 = vmatprep.mubr.bf16.mxu0 0
      %1758 = vmatmul.mubr.bf16.gmra.mrb[0].mxu0 %v1596
      %v1759 = vpop.f32.mrb[0].mxu0
      %v1760 = vadd.f32 %v596, %v1759
      %v1761 = vpop.f32.mrb[0].mxu0
      %v1762 = vpop.f32.mrb[0].mxu0
      %v1763 = vadd.f32 %v601, %v1762
      %v1764 = vpop.f32.mrb[0].mxu0
      %1765 = vmatprep.mubr.bf16.mxu0 0
      %1766 = vmatmul.mubr.bf16.gmra.mrb[0].mxu0 %v1597
      %v1767 = vpop.f32.mrb[0].mxu0
      %v1768 = vadd.f32 %v606, %v1767
      %v1769 = vpop.f32.mrb[0].mxu0
      %v1770 = vpop.f32.mrb[0].mxu0
      %v1771 = vadd.f32 %v611, %v1770
      %v1772 = vpop.f32.mrb[0].mxu0
      %1773 = vmatprep.mubr.bf16.mxu0 0
      %1774 = vmatmul.mubr.bf16.gmra.mrb[0].mxu0 %v1598
      %v1775 = vpop.f32.mrb[0].mxu0
      %v1776 = vadd.f32 %v616, %v1775
      %v1777 = vpop.f32.mrb[0].mxu0
      %v1778 = vpop.f32.mrb[0].mxu0
      %v1779 = vadd.f32 %v621, %v1778
      %v1780 = vpop.f32.mrb[0].mxu0
      %1781 = vmatprep.mubr.bf16.mxu0 0
      %1782 = vmatmul.mubr.bf16.gmra.mrb[0].mxu0 %v1599
      %v1783 = vpop.f32.mrb[0].mxu0
      %v1784 = vadd.f32 %v626, %v1783
      %v1785 = vpop.f32.mrb[0].mxu0
      %v1786 = vpop.f32.mrb[0].mxu0
      %v1787 = vadd.f32 %v631, %v1786
      %v1788 = vpop.f32.mrb[0].mxu0
      %1789 = vmatprep.mubr.bf16.mxu0 0
      %1790 = vmatmul.mubr.bf16.gmra.mrb[0].mxu0 %v1600
      %v1791 = vpop.f32.mrb[0].mxu0
      %v1792 = vadd.f32 %v636, %v1791
      %v1793 = vpop.f32.mrb[0].mxu0
      %v1794 = vpop.f32.mrb[0].mxu0
      %v1795 = vadd.f32 %v641, %v1794
      %v1796 = vpop.f32.mrb[0].mxu0
      %1797 = vmatprep.mubr.bf16.mxu0 0
      %1798 = vmatmul.mubr.bf16.gmra.mrb[0].mxu0 %v1601
      %v1799 = vpop.f32.mrb[0].mxu0
      %v1800 = vadd.f32 %v646, %v1799
      %v1801 = vpop.f32.mrb[0].mxu0
      %v1802 = vpop.f32.mrb[0].mxu0
      %v1803 = vadd.f32 %v651, %v1802
      %v1804 = vpop.f32.mrb[0].mxu0
      %1805 = vmatprep.mubr.bf16.mxu0 0
      %1806 = vmatmul.mubr.bf16.gmra.mrb[0].mxu0 %v1602
      %v1807 = vpop.f32.mrb[0].mxu0
      %v1808 = vadd.f32 %v656, %v1807
      %v1809 = vpop.f32.mrb[0].mxu0
      %v1810 = vpop.f32.mrb[0].mxu0
      %v1811 = vadd.f32 %v661, %v1810
      %v1812 = vpop.f32.mrb[0].mxu0
      %1813 = vmatprep.mubr.bf16.mxu0 0
      %1814 = vmatmul.mubr.bf16.gmra.mrb[0].mxu0 %v1603
      %v1815 = vpop.f32.mrb[0].mxu0
      %v1816 = vadd.f32 %v666, %v1815
      %v1817 = vpop.f32.mrb[0].mxu0
      %v1818 = vpop.f32.mrb[0].mxu0
      %v1819 = vadd.f32 %v671, %v1818
      %v1820 = vpop.f32.mrb[0].mxu0
      %1821 = vdwg.mxu0
      %v1822 = vtanh.pop %v1647
      %v1823 = vtanh.pop %v1649
      %v1824 = vtanh.pop %v1760
      %v1825 = vtanh.pop %v1651
      %v1826 = vtanh.pop %v1653
      %v1827 = vtanh.pop %v1763
      %v1828 = vtanh.pop %v1657
      %v1829 = vtanh.pop %v1659
      %v1830 = vtanh.pop %v1768
      %v1831 = vtanh.pop %v1661
      %v1832 = vtanh.pop %v1663
      %v1833 = vtanh.pop %v1771
      %v1834 = vtanh.pop %v1667
      %v1835 = vtanh.pop %v1669
      %v1836 = vtanh.pop %v1776
      %v1837 = vtanh.pop %v1671
      %v1838 = vtanh.pop %v1673
      %v1839 = vtanh.pop %v1779
      %v1840 = vtanh.pop %v1677
      %v1841 = vtanh.pop %v1679
      %v1842 = vtanh.pop %v1784
      %v1843 = vtanh.pop %v1681
      %v1844 = vtanh.pop %v1683
      %v1845 = vtanh.pop %v1787
      %v1846 = vtanh.pop %v1687
      %v1847 = vtanh.pop %v1689
      %v1848 = vtanh.pop %v1792
      %v1849 = vtanh.pop %v1691
      %v1850 = vtanh.pop %v1693
      %v1851 = vtanh.pop %v1795
      %v1852 = vtanh.pop %v1697
      %v1853 = vtanh.pop %v1699
      %v1854 = vtanh.pop %v1800
      %v1855 = vtanh.pop %v1701
      %v1856 = vtanh.pop %v1703
      %v1857 = vtanh.pop %v1803
      %v1858 = vtanh.pop %v1707
      %v1859 = vtanh.pop %v1709
      %v1860 = vtanh.pop %v1808
      %v1861 = vtanh.pop %v1711
      %v1862 = vtanh.pop %v1713
      %v1863 = vtanh.pop %v1811
      %v1864 = vtanh.pop %v1717
      %v1865 = vtanh.pop %v1719
      %v1866 = vtanh.pop %v1816
      %v1867 = vtanh.pop %v1721
      %v1868 = vtanh.pop %v1723
      %v1869 = vtanh.pop %v1819
      %v1870 = vmul.f32 %v692, %v1822
      %v1871 = vmul.f32 %v692, %v1823
      %v1872 = vmul.f32 %v692, %v1824
      %v1873 = vmul.f32 %v697, %v1825
      %v1874 = vmul.f32 %v697, %v1826
      %v1875 = vmul.f32 %v697, %v1827
      %v1876 = vmul.f32 %v702, %v1828
      %v1877 = vmul.f32 %v702, %v1829
      %v1878 = vmul.f32 %v702, %v1830
      %v1879 = vmul.f32 %v707, %v1831
      %v1880 = vmul.f32 %v707, %v1832
      %v1881 = vmul.f32 %v707, %v1833
      %v1882 = vmul.f32 %v712, %v1834
      %v1883 = vmul.f32 %v712, %v1835
      %v1884 = vmul.f32 %v712, %v1836
      %v1885 = vmul.f32 %v717, %v1837
      %v1886 = vmul.f32 %v717, %v1838
      %v1887 = vmul.f32 %v717, %v1839
      %v1888 = vmul.f32 %v722, %v1840
      %v1889 = vmul.f32 %v722, %v1841
      %v1890 = vmul.f32 %v722, %v1842
      %v1891 = vmul.f32 %v727, %v1843
      %v1892 = vmul.f32 %v727, %v1844
      %v1893 = vmul.f32 %v727, %v1845
      %v1894 = vmul.f32 %v732, %v1846
      %v1895 = vmul.f32 %v732, %v1847
      %v1896 = vmul.f32 %v732, %v1848
      %v1897 = vmul.f32 %v737, %v1849
      %v1898 = vmul.f32 %v737, %v1850
      %v1899 = vmul.f32 %v737, %v1851
      %v1900 = vmul.f32 %v742, %v1852
      %v1901 = vmul.f32 %v742, %v1853
      %v1902 = vmul.f32 %v742, %v1854
      %v1903 = vmul.f32 %v747, %v1855
      %v1904 = vmul.f32 %v747, %v1856
      %v1905 = vmul.f32 %v747, %v1857
      %v1906 = vmul.f32 %v752, %v1858
      %v1907 = vmul.f32 %v752, %v1859
      %v1908 = vmul.f32 %v752, %v1860
      %v1909 = vmul.f32 %v757, %v1861
      %v1910 = vmul.f32 %v757, %v1862
      %v1911 = vmul.f32 %v757, %v1863
      %v1912 = vmul.f32 %v762, %v1864
      %v1913 = vmul.f32 %v762, %v1865
      %v1914 = vmul.f32 %v762, %v1866
      %v1915 = vmul.f32 %v767, %v1867
      %v1916 = vmul.f32 %v767, %v1868
      %v1917 = vmul.f32 %v767, %v1869
      %v1918 = vadd.f32 %v1870, %v1873
      %v1919 = vadd.f32 %v1918, %v1876
      %v1920 = vadd.f32 %v1919, %v1879
      %v1921 = vadd.f32 %v1920, %v1882
      %v1922 = vadd.f32 %v1921, %v1885
      %v1923 = vadd.f32 %v1922, %v1888
      %v1924 = vadd.f32 %v1923, %v1891
      %v1925 = vadd.f32 %v1924, %v1894
      %v1926 = vadd.f32 %v1925, %v1897
      %v1927 = vadd.f32 %v1926, %v1900
      %v1928 = vadd.f32 %v1927, %v1903
      %v1929 = vadd.f32 %v1928, %v1906
      %v1930 = vadd.f32 %v1929, %v1909
      %v1931 = vadd.f32 %v1930, %v1912
      %v1932 = vadd.f32 %v1931, %v1915
      %v1933 = vrot.slane %v1932, 4
      %v1934 = vadd.f32 %v1932, %v1933
      %v1935 = vrot.slane %v1934, 2
      %v1936 = vadd.f32 %v1934, %v1935
      %v1937 = vrot.slane %v1936, 1
      %v1938 = vadd.f32 %v1936, %v1937
      %v1939 = vadd.f32 %v1871, %v1874
      %v1940 = vadd.f32 %v1939, %v1877
      %v1941 = vadd.f32 %v1940, %v1880
      %v1942 = vadd.f32 %v1941, %v1883
      %v1943 = vadd.f32 %v1942, %v1886
      %v1944 = vadd.f32 %v1943, %v1889
      %v1945 = vadd.f32 %v1944, %v1892
      %v1946 = vadd.f32 %v1945, %v1895
      %v1947 = vadd.f32 %v1946, %v1898
      %v1948 = vadd.f32 %v1947, %v1901
      %v1949 = vadd.f32 %v1948, %v1904
      %v1950 = vadd.f32 %v1949, %v1907
      %v1951 = vadd.f32 %v1950, %v1910
      %v1952 = vadd.f32 %v1951, %v1913
      %v1953 = vadd.f32 %v1952, %v1916
      %v1954 = vrot.slane %v1953, 4
      %v1955 = vadd.f32 %v1953, %v1954
      %v1956 = vrot.slane %v1955, 2
      %v1957 = vadd.f32 %v1955, %v1956
      %v1958 = vrot.slane %v1957, 1
      %v1959 = vadd.f32 %v1957, %v1958
      %v1960 = vadd.f32 %v1872, %v1875
      %v1961 = vadd.f32 %v1960, %v1878
      %v1962 = vadd.f32 %v1961, %v1881
      %v1963 = vadd.f32 %v1962, %v1884
      %v1964 = vadd.f32 %v1963, %v1887
      %v1965 = vadd.f32 %v1964, %v1890
      %v1966 = vadd.f32 %v1965, %v1893
      %v1967 = vadd.f32 %v1966, %v1896
      %v1968 = vadd.f32 %v1967, %v1899
      %v1969 = vadd.f32 %v1968, %v1902
      %v1970 = vadd.f32 %v1969, %v1905
      %v1971 = vadd.f32 %v1970, %v1908
      %v1972 = vadd.f32 %v1971, %v1911
      %v1973 = vadd.f32 %v1972, %v1914
      %v1974 = vadd.f32 %v1973, %v1917
      %v1975 = vrot.slane %v1974, 4
      %v1976 = vadd.f32 %v1974, %v1975
      %v1977 = vrot.slane %v1976, 2
      %v1978 = vadd.f32 %v1976, %v1977
      %v1979 = vrot.slane %v1978, 1
      %v1980 = vadd.f32 %v1978, %v1979
      %1982 = vset.pattern.permute.xlu0 0
      %1983 = vperm.xlu0 %1982, %v769
      %v1984 = vpop.permute.xlu0 %1983
      %v1986 = vlaneseq
      %v1987 = vshrl.u32 %v1986, 7
      %v1988 = vsub.s32 0, %v1987
      %v1989 = vrot.slane %v1984, %v1988
      %v1990 = vadd.f32 %v1938, %v1989
      %v1991 = vadd.f32 %v1959, %v1989
      %v1992 = vadd.f32 %v1980, %v1989
      %v1996 = vcombine.low %v1990, %v1991
      %v1998 = vunpack.c.l.s4 1966171168
      %v1999 = vunpack.c.0.s8 %v1998
      %v2000 = vlaneseq
      %v2001 = vshrl.u32 %v2000, 7
      %v2002 = vsub.s32 %v1999, %v2001
      %v2003 = vrot.slane %v1996, %v2002
      %v2005 = vunpack.c.l.s4 1966171168
      %v2006 = vunpack.c.0.s8 %v2005
      %v2007 = vlaneseq
      %v2008 = vshrl.u32 %v2007, 7
      %v2009 = vsub.s32 %v2006, %v2008
      %v2010 = vrot.slane %v1992, %v2009
      %v2011 = vcombine.low %v2003, %v2010
      %v2013 = vunpack.c.l.s4 1966171168
      %v2014 = vunpack.c.0.s8 %v2013
      %v2015 = vlaneseq
      %v2016 = vshrl.u32 %v2015, 7
      %v2017 = vsub.s32 %v2014, %v2016
      %v2018 = vrot.slane %v2011, %v2017
      %v2020 = vlaneseq
      %vm2021 = vcmp.ge.s32.totalorder %v2020, 0
      %vm2022 = vcmp.lt.s32.totalorder %v2020, 384
      %vm2023 = vmand %vm2021, %vm2022
      %2024 = vst.msk [vmem:[%s334] sm:$0x7] %vm2023, %v2018
      %s2025 = smul.u32 3, %s22
      %p2026 = scmp.lt.s32.totalorder %s2025, 5
      %s2027 = scalar_select %p2026, %s2025, 5
      %s2028 = scalar_lea.vmem %s9, %s2027
      // Predicated region
      $region57: #{pinn_forward.1} parent=55 // pred_check
        %p2029 = pneg %p234
      $region58: #{pinn_forward.1} parent=55 // pred_check_branch
        %2031 = sbr.rel (%p2029) target = $region60
      $region59: #{pinn_forward.1} parent=55 // pred_region
        %s2032 = smul.u32 3, %s22
      $region60: #{pinn_forward.1} parent=55 // pred_fallthru
        _
    $region56: #{pinn_forward.1} parent=5 // pred_fallthru
      _
    %p2033 = scmp.le.s32.totalorder 2, %s17
    // Predicated region
    $region61: #{pinn_forward.1} parent=5 // pred_check
      %p2034 = pneg %p2033
    $region62: #{pinn_forward.1} parent=5 // pred_check_branch
      %2036 = sbr.rel (%p2034) target = $region64
    $region63: #{pinn_forward.1} parent=5 // pred_region
      %s2037 = ssub.s32 %s17, 2
      // Predicated region
      $region65: #{pinn_forward.1} parent=63 // pred_check
        %p2038 = pneg %p240
      $region66: #{pinn_forward.1} parent=63 // pred_check_branch
        %2040 = sbr.rel (%p2038) target = $region68
      $region67: #{pinn_forward.1} parent=63 // pred_region
        %s2041 = smul.u32 3, %s23
        %p2042 = scmp.lt.s32.totalorder %s2041, 5
        %s2043 = scalar_select %p2042, %s2041, 5
        %s2044 = scalar_lea.vmem %s9, %s2043
      $region68: #{pinn_forward.1} parent=63 // pred_fallthru
        _
    $region64: #{pinn_forward.1} parent=5 // pred_fallthru
      _
  $region6: #{pinn_forward.1} parent=0 // loop_footer
    %s21 = sadd.s32 1, %s17
  $region7: #{pinn_forward.1} parent=0 // loop_footer_branch
    %16 = sbr.rel target = $region3
  $region8: #{pinn_forward.1} parent=0 // loop_exit
    _

</llo_original>
